<compile_context>
chip_gen: v5e
topology: v5e:2x2
jax: 0.10.0
libtpu: 0.0.40
codegen_flags: <defaults>
</compile_context>

<pallas_src>
import functools
import math

import jax
import jax.numpy as jnp
from jax.experimental import pallas as pl
from jax.experimental.pallas import tpu as pltpu


_PW_TILE_BUDGET = 8 * 1024 * 1024    # bytes for double-buffered row tiles
_VMEM_LIMIT = 32 * 1024 * 1024       # safe on v5e/v6e (128 MiB) and v7x (64 MiB)


# ---------------------------------------------------------------------------
# Pallas kernels
# ---------------------------------------------------------------------------
def _pw_kernel(*refs, act, n_x, n_out, n_res):
    """Generalized fused 1x1 conv (MXU matmul).

    For each output head j:
        y_j = [SiLU]( sum_i x_i @ w[j][i] + b[j] )
    Residual tensors (only with a single head) are added post-activation.

    Ref order:
        x_0 .. x_{n_x-1}                         (TM, Cin_i)
        for j: w_{j,0} .. w_{j,n_x-1}, b_j       (Cin_i, Cb_j), (1, Cb_j)
        r_0 .. r_{n_res-1}                       (TM, Cb_0)
        o_0 .. o_{n_out-1}                       (TM, Cb_j)
    """
    pos = 0
    x_refs = refs[pos:pos + n_x]; pos += n_x
    w_refs, b_refs = [], []
    for _ in range(n_out):
        w_refs.append(refs[pos:pos + n_x]); pos += n_x
        b_refs.append(refs[pos]); pos += 1
    res_refs = refs[pos:pos + n_res]; pos += n_res
    o_refs = refs[pos:pos + n_out]

    xs = [r[...] for r in x_refs]                # read each input tile once
    for j in range(n_out):
        y = jnp.dot(xs[0], w_refs[j][0][...], preferred_element_type=jnp.float32)
        for i in range(1, n_x):
            y = y + jnp.dot(xs[i], w_refs[j][i][...],
                            preferred_element_type=jnp.float32)
        y = y + b_refs[j][...].astype(jnp.float32)
        if act:
            y = y * jax.nn.sigmoid(y)            # SiLU
        if j == 0:
            for r in res_refs:                   # fused shortcut/residual adds
                y = y + r[...].astype(jnp.float32)
        o_refs[j][...] = y.astype(o_refs[j].dtype)


def _dw_kernel(x_ref, w_ref, b_ref, o_ref, xp_ref, *, k, H, W, act):
    """kxk depthwise conv, stride 1, same padding (+bias) (+SiLU).

    x_ref  : (1, H, W, C) one batch element (storage dtype, possibly bf16)
    w_ref  : (k*k, C) per-channel taps (BN scale folded in, f32)
    b_ref  : (1, C) f32
    xp_ref : (H+2p, W+2p, C) VMEM staging scratch in x.dtype
    """
    p = k // 2
    C = x_ref.shape[-1]
    Hp, Wp = H + 2 * p, W + 2 * p
    dt = xp_ref.dtype

    # Halo-only zeroing (interior is fully overwritten right below): no
    # full-(Hp,Wp,C) memset, only the 2p row slabs and 2p column strips.
    xp_ref[:p, :, :] = jnp.zeros((p, Wp, C), dt)
    xp_ref[H + p:, :, :] = jnp.zeros((p, Wp, C), dt)
    xp_ref[p:H + p, :p, :] = jnp.zeros((H, p, C), dt)
    xp_ref[p:H + p, W + p:, :] = jnp.zeros((H, p, C), dt)
    xp_ref[p:H + p, p:W + p, :] = x_ref[0].astype(dt)   # explicit cast

    w = w_ref[...].astype(jnp.float32)        # (k*k, C)  -- VPU math in f32
    b = b_ref[...].astype(jnp.float32)        # (1, C)
    xp = xp_ref[...].astype(jnp.float32)      # (Hp, Wp, C)

    # Hoist the W (sublane) shift out of the tap loop: k shifted slabs instead
    # of k*k misaligned slices.
    slabs = [xp[:, dx:dx + W, :] for dx in range(k)]     # each (Hp, W, C)

    # Accumulate in 8-row strips: the strip accumulator stays in vregs across
    # all k*k taps and is stored exactly once per strip.
    TH = 8
    for h0 in range(0, H, TH):
        th = min(TH, H - h0)
        acc = jnp.zeros((th, W, C), jnp.float32)
        for dy in range(k):                    # static tap loop (k is const)
            for dx in range(k):
                acc = acc + slabs[dx][h0 + dy:h0 + dy + th] * w[dy * k + dx, :]
        y = acc + b
        if act:
            y = y * jax.nn.sigmoid(y)          # SiLU
        o_ref[0, h0:h0 + th] = y.astype(o_ref.dtype)


# ---------------------------------------------------------------------------
# Pallas wrappers
# ---------------------------------------------------------------------------
def pallas_pw(xs, outs, act=True, residuals=()):
    """Fused 1x1 Conv (BN folded offline) + optional SiLU + fused residuals.

    xs   : tensor or tuple of NHWC tensors forming a conceptual channel concat
           (the concat is never materialized in HBM).
    outs : list of {'ws': [w_i of shape (Cin_i, Cout_j)], 'b': (1, Cout_j)} --
           one entry per independent output head.
    residuals : tensors of shape (N,H,W,Cout_0) added after activation of the
           first (and only) output head.
    """
    if not isinstance(xs, (tuple, list)):
        xs = (xs,)
    xs = tuple(xs)
    n_x, n_out, n_res = len(xs), len(outs), len(residuals)
    assert n_out >= 1 and (n_res == 0 or n_out == 1)

    N, H, W = xs[0].shape[:3]
    cins = [int(x.shape[-1]) for x in xs]
    couts = [int(o['ws'][0].shape[-1]) for o in outs]
    dtype = xs[0].dtype
    M = N * H * W

    xms = [x.reshape(M, c) for x, c in zip(xs, cins)]      # free reshapes
    rms = [r.reshape(M, couts[0]) for r in residuals]

    # Cout blocking (matmul-N axis): full width for narrow layers, 128/256
    # lane blocks for wide ones (keeps weight/output tiles inside the VMEM
    # budget on the 64 MiB v7x part and stores lane-dense).
    if n_out == 1 and couts[0] > 512 and couts[0] % 128 == 0:
        cblk = [256 if couts[0] % 256 == 0 else 128]
    else:
        cblk = list(couts)
    grid_n = pl.cdiv(couts[0], cblk[0]) if n_out == 1 else 1

    # Row tile from an explicit VMEM byte budget (double-buffered tiles),
    # multiple of 8 sublanes.  No wrapper-side padding: ragged boundary
    # blocks are masked by Pallas (garbage rows only feed masked-out rows).
    itemsize = dtype.itemsize
    cols = sum(cins) + sum(cblk) + n_res * cblk[0]
    tm = _PW_TILE_BUDGET // max(1, 2 * cols * itemsize)
    tm = max(8, min(1024, (tm // 8) * 8))
    tm = min(tm, (M // 8) * 8) if M >= 8 else M
    grid_m = pl.cdiv(M, tm)

    flat, in_specs = [], []
    for xm, c in zip(xms, cins):
        flat.append(xm)
        in_specs.append(pl.BlockSpec((tm, c), lambda i, j: (i, 0)))
    for j in range(n_out):
        for i in range(n_x):
            flat.append(outs[j]['ws'][i])
            in_specs.append(pl.BlockSpec((cins[i], cblk[j]), lambda i_, j_: (0, j_)))
        flat.append(outs[j]['b'])
        in_specs.append(pl.BlockSpec((1, cblk[j]), lambda i_, j_: (0, j_)))
    for r in rms:
        flat.append(r)
        in_specs.append(pl.BlockSpec((tm, cblk[0]), lambda i_, j_: (i_, j_)))

    out_shapes = [jax.ShapeDtypeStruct((M, couts[j]), dtype) for j in range(n_out)]
    out_specs = [pl.BlockSpec((tm, cblk[j]), lambda i_, j_: (i_, j_))
                 for j in range(n_out)]

    results = pl.pallas_call(
        functools.partial(_pw_kernel, act=act, n_x=n_x, n_out=n_out, n_res=n_res),
        out_shape=out_shapes,
        grid=(grid_m, grid_n),
        in_specs=in_specs,
        out_specs=out_specs,
        compiler_params=pltpu.CompilerParams(
            dimension_semantics=("parallel", "parallel"),
            vmem_limit_bytes=_VMEM_LIMIT),
    )(*flat)

    outs_nhwc = [r.reshape(N, H, W, couts[j]) for j, r in enumerate(results)]
    return outs_nhwc[0] if n_out == 1 else tuple(outs_nhwc)


def pallas_dw(x, params, k, act=True):
    """kxk depthwise Conv (stride 1, same pad, BN folded) + optional SiLU."""
    w, b = params['w'], params['b']
    N, H, W, C = x.shape
    p = k // 2
    return pl.pallas_call(
        functools.partial(_dw_kernel, k=k, H=H, W=W, act=act),
        out_shape=jax.ShapeDtypeStruct((N, H, W, C), x.dtype),
        grid=(N,),
        in_specs=[
            pl.BlockSpec((1, H, W, C), lambda n: (n, 0, 0, 0)),
            pl.BlockSpec((k * k, C), lambda n: (0, 0)),
            pl.BlockSpec((1, C), lambda n: (0, 0)),
        ],
        out_specs=pl.BlockSpec((1, H, W, C), lambda n: (n, 0, 0, 0)),
        scratch_shapes=[pltpu.VMEM((H + 2 * p, W + 2 * p, C), x.dtype)],
        compiler_params=pltpu.CompilerParams(
            dimension_semantics=("parallel",),
            vmem_limit_bytes=_VMEM_LIMIT),
    )(x, w, b)


# ---------------------------------------------------------------------------
# Deterministic raw parameter construction (synthetic conv weights + BN stats)
# ---------------------------------------------------------------------------
def _bn_params(key, cout):
    kg, kb, km, kv = jax.random.split(key, 4)
    gamma = 1.0 + 0.1 * jax.random.normal(kg, (cout,), jnp.float32)
    beta = 0.1 * jax.random.normal(kb, (cout,), jnp.float32)
    mean = 0.1 * jax.random.normal(km, (cout,), jnp.float32)
    var = 1.0 + 0.1 * jnp.abs(jax.random.normal(kv, (cout,), jnp.float32))
    scale = gamma / jnp.sqrt(var + 1e-5)
    bias = beta - mean * scale
    return scale, bias


def make_pw(key, cin, cout):
    kw, kbn = jax.random.split(key)
    w = jax.random.normal(kw, (cin, cout), jnp.float32) / math.sqrt(cin)
    s, b = _bn_params(kbn, cout)
    return {'w': w, 's': s, 'b': b}


def make_dw(key, c, k):
    kw, kbn = jax.random.split(key)
    w = jax.random.normal(kw, (k * k, c), jnp.float32) / float(k)
    s, b = _bn_params(kbn, c)
    return {'w': w, 's': s, 'b': b}


def make_msga_conv(key, c1, c2):
    min_ch = c2 // 2
    half = min_ch // 2
    ks = jax.random.split(key, 6)
    p = {'cv1': make_pw(ks[0], c1, min_ch),
         'dw3': make_dw(ks[1], half, 3),
         'dw5': make_dw(ks[2], min_ch - half, 5),
         'pw_out': make_pw(ks[3], c2, c2),
         'add': c1 != c2}
    if p['add']:
        p['sc_dw'] = make_dw(ks[4], c1, 3)
        p['sc_pw'] = make_pw(ks[5], c1, c2)
    return p


def make_bottleneck(key, c1, c2):
    c_ = c2 // 2
    k1, k2, k3, k4 = jax.random.split(key, 4)
    p = {'m1': make_msga_conv(k1, c1, c_),
         'm2': make_msga_conv(k2, c_, c2),
         'add': c1 != c2}
    if p['add']:
        p['sc_dw'] = make_dw(k3, c1, 3)
        p['sc_pw'] = make_pw(k4, c1, c2)
    return p


def make_c3msgr(key, c1, c2, n=1, e=0.5):
    c_ = int(c2 * e)
    ks = jax.random.split(key, 3 + n)
    return {'cv1': make_pw(ks[0], c1, c_),
            'cv2': make_pw(ks[1], c1, c_),
            'cv3': make_pw(ks[2], 2 * c_, c2),
            'm': [make_bottleneck(ks[3 + i], c_, c_) for i in range(n)],
            'c_': c_}


# ---------------------------------------------------------------------------
# Offline parameter preparation for the Pallas path (BN fold, branch merging)
# ---------------------------------------------------------------------------
def prep_pw(p, dtype=jnp.float32, cin_splits=None):
    """Fold BN scale into the 1x1 weight; optionally split along Cin so the
    kernel can consume multiple un-concatenated inputs."""
    w = (p['w'] * p['s'][None, :]).astype(dtype)
    b = p['b'].reshape(1, -1).astype(jnp.float32)
    if cin_splits is None:
        ws = [w]
    else:
        ws, off = [], 0
        for c in cin_splits:
            ws.append(w[off:off + c])
            off += c
        assert off == w.shape[0]
    return {'ws': ws, 'b': b}


def prep_dw(p):
    return {'w': (p['w'] * p['s'][None, :]).astype(jnp.float32),
            'b': p['b'].reshape(1, -1).astype(jnp.float32)}


def prep_dw35(p3, p5):
    """Merge the 3x3 and 5x5 depthwise branches into one 5x5 depthwise conv
    (3x3 taps zero-embedded).  TODO(synk): if the kernel becomes VALU-bound,
    run 9 taps on the first channel group instead of 25 zero-padded taps."""
    c3 = p3['w'].shape[1]
    w3 = (p3['w'] * p3['s'][None, :]).reshape(3, 3, c3)
    w3p = jnp.zeros((5, 5, c3), jnp.float32).at[1:4, 1:4, :].set(w3)
    w5 = (p5['w'] * p5['s'][None, :]).reshape(5, 5, -1)
    w = jnp.concatenate([w3p, w5], axis=-1).reshape(25, -1)
    b = jnp.concatenate([p3['b'], p5['b']]).reshape(1, -1)
    return {'w': w.astype(jnp.float32), 'b': b.astype(jnp.float32)}


def prepare_msga_conv(p, dtype):
    c2 = int(p['pw_out']['w'].shape[1])
    min_ch = c2 // 2
    kp = {'cv1': prep_pw(p['cv1'], dtype),
          'dw35': prep_dw35(p['dw3'], p['dw5']),
          'pw_out': prep_pw(p['pw_out'], dtype, cin_splits=[min_ch, c2 - min_ch]),
          'add': p['add']}
    if p['add']:
        kp['sc_dw'] = prep_dw(p['sc_dw'])
        kp['sc_pw'] = prep_pw(p['sc_pw'], dtype)
    return kp


def prepare_bottleneck(p, dtype):
    kp = {'m1': prepare_msga_conv(p['m1'], dtype),
          'm2': prepare_msga_conv(p['m2'], dtype),
          'add': p['add']}
    if p['add']:
        kp['sc_dw'] = prep_dw(p['sc_dw'])
        kp['sc_pw'] = prep_pw(p['sc_pw'], dtype)
    return kp


def prepare_c3msgr(p, dtype=jnp.float32):
    c_ = p['c_']
    return {'cv1': prep_pw(p['cv1'], dtype),
            'cv2': prep_pw(p['cv2'], dtype),
            'cv3': prep_pw(p['cv3'], dtype, cin_splits=[c_, c_]),
            'm': [prepare_bottleneck(bp, dtype) for bp in p['m']],
            'c_': c_}


# ---------------------------------------------------------------------------
# Pallas forward pass
# ---------------------------------------------------------------------------
def msga_conv_fwd_pallas(x, kp, extra_residual=None):
    x1 = pallas_pw(x, [kp['cv1']], act=True)            # (N,H,W,min_ch)
    # merged k=3 / k=5 depthwise over all min_ch channels in one call
    x2 = pallas_dw(x1, kp['dw35'], 5, act=True)

    residuals = []
    if kp['add']:
        s = pallas_dw(x, kp['sc_dw'], 3, act=False)
        s = pallas_pw(s, [kp['sc_pw']], act=False)
        residuals.append(s)
    else:
        residuals.append(x)                              # identity shortcut
    if extra_residual is not None:
        residuals.append(extra_residual)
    # conv1x1 + SiLU + all residual adds fused; (x1, x2) consumed directly --
    # the torch.cat is folded into split weight blocks (no HBM concat).
    return pallas_pw((x1, x2), [kp['pw_out']], act=True,
                     residuals=tuple(residuals))


def bottleneck_fwd_pallas(x, kp):
    if kp['add']:
        s = pallas_dw(x, kp['sc_dw'], 3, act=False)
        s = pallas_pw(s, [kp['sc_pw']], act=False)
    else:
        s = x
    y = msga_conv_fwd_pallas(x, kp['m1'])
    # bottleneck residual fused into the final pointwise of m2
    return msga_conv_fwd_pallas(y, kp['m2'], extra_residual=s)


def c3msgr_fwd_pallas(x, kp):
    # Fused cv1+cv2: one read of x, two output heads (no channel slicing and
    # no concat writeback between kernels).
    y1, y2 = pallas_pw(x, [kp['cv1'], kp['cv2']], act=True)
    for bp in kp['m']:
        y1 = bottleneck_fwd_pallas(y1, bp)
    # cv3 consumes (y1, y2) directly (cat folded into split weight blocks).
    return pallas_pw((y1, y2), [kp['cv3']], act=True)


# ---------------------------------------------------------------------------
# Pure-JAX reference (naive, un-fused) for correctness checking
# ---------------------------------------------------------------------------
def ref_pw(x, p, act=True):
    y = jnp.einsum('nhwc,cd->nhwd', x, p['w']) * p['s'] + p['b']
    return y * jax.nn.sigmoid(y) if act else y


def ref_dw(x, p, k, act=True):
    N, H, W, C = x.shape
    pad = k // 2
    xp = jnp.pad(x, ((0, 0), (pad, pad), (pad, pad), (0, 0)))
    wk = p['w'].reshape(k, k, C)
    acc = jnp.zeros_like(x)
    for dy in range(k):
        for dx in range(k):
            acc = acc + xp[:, dy:dy + H, dx:dx + W, :] * wk[dy, dx]
    y = acc * p['s'] + p['b']
    return y * jax.nn.sigmoid(y) if act else y


def msga_conv_fwd_ref(x, p):
    x1 = ref_pw(x, p['cv1'], act=True)
    half = p['dw3']['w'].shape[1]
    a = ref_dw(x1[..., :half], p['dw3'], 3, act=True)
    b = ref_dw(x1[..., half:], p['dw5'], 5, act=True)
    out = jnp.concatenate([x1, a, b], axis=-1)
    if p['add']:
        s = ref_dw(x, p['sc_dw'], 3, act=False)
        s = ref_pw(s, p['sc_pw'], act=False)
    else:
        s = x
    return ref_pw(out, p['pw_out'], act=True) + s


def bottleneck_fwd_ref(x, p):
    y = msga_conv_fwd_ref(x, p['m1'])
    y = msga_conv_fwd_ref(y, p['m2'])
    if p['add']:
        s = ref_dw(x, p['sc_dw'], 3, act=False)
        s = ref_pw(s, p['sc_pw'], act=False)
    else:
        s = x
    return y + s


def c3msgr_fwd_ref(x, p):
    y1 = ref_pw(x, p['cv1'], act=True)
    for bp in p['m']:
        y1 = bottleneck_fwd_ref(y1, bp)
    y2 = ref_pw(x, p['cv2'], act=True)
    return ref_pw(jnp.concatenate([y1, y2], axis=-1), p['cv3'], act=True)


# ---------------------------------------------------------------------------
if __name__ == "__main__":
    # --- standalone check of the generic fused pointwise kernel -------------
    # exercises: multi-input (no concat), ragged M (no wrapper pad), Cout
    # blocking (wide-layer path), fused residual add.
    kk = jax.random.split(jax.random.PRNGKey(1), 6)
    ca, cb, co = 64, 32, 768
    xa = jax.random.normal(kk[0], (1, 10, 25, ca), jnp.float32)   # M = 250
    xb = jax.random.normal(kk[1], (1, 10, 25, cb), jnp.float32)
    w1 = jax.random.normal(kk[2], (ca, co), jnp.float32) / math.sqrt(ca)
    w2 = jax.random.normal(kk[3], (cb, co), jnp.float32) / math.sqrt(cb)
    bb = 0.1 * jax.random.normal(kk[4], (1, co), jnp.float32)
    res = jax.random.normal(kk[5], (1, 10, 25, co), jnp.float32)
    got = pallas_pw((xa, xb), [{'ws': [w1, w2], 'b': bb}], act=True,
                    residuals=(res,))
    pre = (jnp.einsum('nhwc,cd->nhwd', xa, w1)
           + jnp.einsum('nhwc,cd->nhwd', xb, w2) + bb)
    want = pre * jax.nn.sigmoid(pre) + res
    pw_err = float(jnp.max(jnp.abs(got - want)))
    assert pw_err < 1e-3 * (1.0 + float(jnp.max(jnp.abs(want)))), pw_err

    # --- full C3MSGR forward -------------------------------------------------
    key = jax.random.PRNGKey(0)
    kx, kpar = jax.random.split(key)

    # Small shapes: batch=2, H=W=16, c1=c2=16 (=> c_=8 hidden channels), NHWC.
    N, H, W, C1, C2 = 2, 16, 16, 16, 16
    x = jax.random.normal(kx, (N, H, W, C1), jnp.float32)

    raw_params = make_c3msgr(kpar, C1, C2, n=1, e=0.5)
    ref = c3msgr_fwd_ref(x, raw_params)

    # f32 path (strict correctness check)
    kparams = prepare_c3msgr(raw_params, dtype=jnp.float32)
    fwd = jax.jit(lambda xx: c3msgr_fwd_pallas(xx, kparams))
    out = jax.block_until_ready(fwd(x))
    assert out.shape == (N, H, W, C2), out.shape
    assert bool(jnp.all(jnp.isfinite(out)))
    max_err = float(jnp.max(jnp.abs(out - ref)))
    assert max_err < 5e-4, f"f32 mismatch vs reference: {max_err}"

    # bf16 storage path (MXU-native dtype, halves HBM/VMEM/DMA bytes for the
    # matmul layers); compared to the f32 reference with a loose tolerance.
    kparams_bf = prepare_c3msgr(raw_params, dtype=jnp.bfloat16)
    fwd_bf = jax.jit(lambda xx: c3msgr_fwd_pallas(xx, kparams_bf))
    out_bf = jax.block_until_ready(fwd_bf(x.astype(jnp.bfloat16)))
    out_bf = out_bf.astype(jnp.float32)
    assert bool(jnp.all(jnp.isfinite(out_bf)))
    diff = out_bf - ref
    rms_rel = float(jnp.sqrt(jnp.mean(diff * diff))
                    / (jnp.sqrt(jnp.mean(ref * ref)) + 1e-6))
    max_abs = float(jnp.max(jnp.abs(diff)))
    assert rms_rel < 0.05 and max_abs < 0.5, (rms_rel, max_abs)

    print("KERNEL_OK")
</pallas_src>

<mosaic_0001>
module attributes {stable_mosaic.version = 11 : i64} {
  func.func @_pw_kernel(%arg0: i32, %arg1: i32, %arg2: memref<248x64xf32, #tpu.memory_space<vmem>>, %arg3: memref<248x32xf32, #tpu.memory_space<vmem>>, %arg4: memref<64x256xf32, #tpu.memory_space<vmem>>, %arg5: memref<32x256xf32, #tpu.memory_space<vmem>>, %arg6: memref<1x256xf32, #tpu.memory_space<vmem>>, %arg7: memref<248x256xf32, #tpu.memory_space<vmem>>, %arg8: memref<248x256xf32, #tpu.memory_space<vmem>>) attributes {dimension_semantics = [#tpu.dimension_semantics<parallel>, #tpu.dimension_semantics<parallel>], iteration_bounds = array<i64: 2, 3>, scalar_prefetch = 0 : i64, scratch_operands = 0 : i64, tpu.core_type = #tpu.core_type<tc>, window_params = [{transform_indices = @transform_0, window_bounds = array<i64: 248, 64>}, {transform_indices = @transform_1, window_bounds = array<i64: 248, 32>}, {transform_indices = @transform_2, window_bounds = array<i64: 64, 256>}, {transform_indices = @transform_3, window_bounds = array<i64: 32, 256>}, {transform_indices = @transform_4, window_bounds = array<i64: 1, 256>}, {transform_indices = @transform_5, window_bounds = array<i64: 248, 256>}, {transform_indices = @transform_6, window_bounds = array<i64: 248, 256>}]} {
    %c0 = arith.constant 0 : index
    %c0_0 = arith.constant 0 : index
    %0 = vector.load %arg2[%c0, %c0_0] : memref<248x64xf32, #tpu.memory_space<vmem>>, vector<248x64xf32>
    %c0_1 = arith.constant 0 : index
    %c0_2 = arith.constant 0 : index
    %1 = vector.load %arg3[%c0_1, %c0_2] : memref<248x32xf32, #tpu.memory_space<vmem>>, vector<248x32xf32>
    %c0_3 = arith.constant 0 : index
    %c0_4 = arith.constant 0 : index
    %2 = vector.load %arg4[%c0_3, %c0_4] : memref<64x256xf32, #tpu.memory_space<vmem>>, vector<64x256xf32>
    %cst = arith.constant dense<0.000000e+00> : vector<248x256xf32>
    %3 = tpu.matmul %0, %2, %cst {dimension_numbers = #tpu.dot_dimension_numbers<[1], [0], [0], [1], [0, 0, 1, 1], [], []>} : vector<248x64xf32>, vector<64x256xf32>, vector<248x256xf32> -> vector<248x256xf32>
    %c0_5 = arith.constant 0 : index
    %c0_6 = arith.constant 0 : index
    %4 = vector.load %arg5[%c0_5, %c0_6] : memref<32x256xf32, #tpu.memory_space<vmem>>, vector<32x256xf32>
    %cst_7 = arith.constant dense<0.000000e+00> : vector<248x256xf32>
    %5 = tpu.matmul %1, %4, %cst_7 {dimension_numbers = #tpu.dot_dimension_numbers<[1], [0], [0], [1], [0, 0, 1, 1], [], []>} : vector<248x32xf32>, vector<32x256xf32>, vector<248x256xf32> -> vector<248x256xf32>
    %6 = arith.addf %3, %5 : vector<248x256xf32>
    %c0_8 = arith.constant 0 : index
    %c0_9 = arith.constant 0 : index
    %7 = vector.load %arg6[%c0_8, %c0_9] : memref<1x256xf32, #tpu.memory_space<vmem>>, vector<1x256xf32>
    %8 = vector.broadcast %7 : vector<1x256xf32> to vector<248x256xf32>
    %9 = arith.addf %6, %8 : vector<248x256xf32>
    %10 = arith.negf %9 : vector<248x256xf32>
    %11 = math.exp %10 : vector<248x256xf32>
    %cst_10 = arith.constant 1.000000e+00 : f32
    %12 = vector.broadcast %cst_10 : f32 to vector<248x256xf32>
    %13 = arith.addf %12, %11 : vector<248x256xf32>
    %14 = arith.divf %12, %13 : vector<248x256xf32>
    %15 = arith.mulf %9, %14 : vector<248x256xf32>
    %c0_11 = arith.constant 0 : index
    %c0_12 = arith.constant 0 : index
    %16 = vector.load %arg7[%c0_11, %c0_12] : memref<248x256xf32, #tpu.memory_space<vmem>>, vector<248x256xf32>
    %17 = arith.addf %15, %16 : vector<248x256xf32>
    %c0_13 = arith.constant 0 : index
    %c0_14 = arith.constant 0 : index
    %18 = vector.load %arg8[%c0_13, %c0_14] : memref<248x256xf32, #tpu.memory_space<vmem>>, vector<248x256xf32>
    tpu.vector_store %arg8[%c0_13, %c0_14], %17 {strides = array<i32>} : memref<248x256xf32, #tpu.memory_space<vmem>>, vector<248x256xf32>,
    return
  }
  func.func @transform_0(%arg0: i32, %arg1: i32) -> (i32, i32) {
    %c0_i32 = arith.constant 0 : i32
    %c0_i32_0 = arith.constant 0 : i32
    return %arg0, %c0_i32 : i32, i32
  }
  func.func @transform_1(%arg0: i32, %arg1: i32) -> (i32, i32) {
    %c0_i32 = arith.constant 0 : i32
    %c0_i32_0 = arith.constant 0 : i32
    return %arg0, %c0_i32 : i32, i32
  }
  func.func @transform_2(%arg0: i32, %arg1: i32) -> (i32, i32) {
    %c0_i32 = arith.constant 0 : i32
    %c0_i32_0 = arith.constant 0 : i32
    return %c0_i32, %arg1 : i32, i32
  }
  func.func @transform_3(%arg0: i32, %arg1: i32) -> (i32, i32) {
    %c0_i32 = arith.constant 0 : i32
    %c0_i32_0 = arith.constant 0 : i32
    return %c0_i32, %arg1 : i32, i32
  }
  func.func @transform_4(%arg0: i32, %arg1: i32) -> (i32, i32) {
    %c0_i32 = arith.constant 0 : i32
    %c0_i32_0 = arith.constant 0 : i32
    return %c0_i32, %arg1 : i32, i32
  }
  func.func @transform_5(%arg0: i32, %arg1: i32) -> (i32, i32) {
    %c0_i32 = arith.constant 0 : i32
    return %arg0, %arg1 : i32, i32
  }
  func.func @transform_6(%arg0: i32, %arg1: i32) -> (i32, i32) {
    %c0_i32 = arith.constant 0 : i32
    return %arg0, %arg1 : i32, i32
  }
}

</mosaic_0001>

<llo_original>
// kernel: tpu_custom_call.1
$region0: #{tpu_custom_call.1}
  #allocation0 [shape = 'u32[]', space=smem, size = 0x4, offset = 0x4, fixed_abs, tag = 'smem constant byte address 0x4 - core index']
  #allocation1 [shape = 'u32[72,128]{1,0:T(1,128)}', space=vmem, size = 0x9000, scoped, tag = 'internal scratch']
  %s0 = inlined_call_operand.vmem [shape: f32[250,64], index: 0, kind: input, shape index: {}]
  %s1 = inlined_call_operand.vmem [shape: f32[250,32], index: 1, kind: input, shape index: {}]
  %s2 = inlined_call_operand.vmem [shape: f32[64,768], index: 2, kind: input, shape index: {}]
  %s3 = inlined_call_operand.vmem [shape: f32[32,768], index: 3, kind: input, shape index: {}]
  %s4 = inlined_call_operand.vmem [shape: f32[1,768], index: 4, kind: input, shape index: {}]
  %s5 = inlined_call_operand.hbm [shape: f32[250,768], index: 5, kind: input, shape index: {}]
  %s6 = inlined_call_operand.hbm [shape: f32[250,768], index: 6, kind: output, shape index: {}]
  %s7 = sld [smem:[#allocation0]]
  $region107: #{tpu_custom_call.1} parent=0
    _
  %s9 = ssub.s32 1, %s7
  %s10 = scalar_select 0, %s9, %s7
  $region1: #{tpu_custom_call.1} parent=0
    #allocation2 [shape = 'u8[131072]{0}', space=vmem, size = 0x20000, scoped, tag = 'input window, operand 2']
    #allocation3 [shape = 'u8[65536]{0}', space=vmem, size = 0x10000, scoped, tag = 'input window, operand 3']
    #allocation4 [shape = 'u8[507904]{0}', space=vmem, size = 0x7c000, scoped, tag = 'input window, operand 5']
    #allocation5 [shape = 's32[2]{0}', space=sflag, size = 0x8, scoped, tag = 'scoped memory for tpu_custom_call.1']
    #allocation6 [shape = 's32[2]{0}', space=sflag, size = 0x8, scoped, tag = 'scoped memory for tpu_custom_call.1']
    #allocation7 [shape = 'u8[507904]{0}', space=vmem, size = 0x7c000, scoped, tag = 'output window, operand 0']
    %11 = vsyncpa [#allocation5], 0
    %s12 = scalar_lea.sflag [#allocation5], 1
    %13 = vsyncpa %s12, 0
    %14 = vsyncpa [#allocation6], 0
    %s15 = scalar_lea.sflag [#allocation6], 1
    %16 = vsyncpa %s15, 0
    loop: start=0, step=1, limit=8
    $region2: #{tpu_custom_call.1} parent=1 // loop_pre_header
      _
    $region3: #{tpu_custom_call.1} parent=1 // loop_header
      %s18 = sphi 0, %s22
      %p19 = scmp.ge.s32.totalorder %s18, 8
      %s25 = sphi 0, %s37
      %s26 = sphi 0, %s33
      %s27 = sphi 0, %s25
      %s28 = sphi 0, %s26
      %s29 = sphi 0, %s27
      %s30 = sphi 0, %s28
      %s40 = sphi 0, %s42
      %s43 = sphi 0, %s40
      %s44 = sphi 0, %s43
      %s60 = sphi 0, %s44
      %s66 = sphi 0, %s68
      %s69 = sphi 0, %s66
      %s70 = sphi 0, %s69
      %s86 = sphi 0, %s70
      %s92 = sphi 0, %s94
      %s95 = sphi 0, %s92
      %s96 = sphi 0, %s95
      %s112 = sphi 0, %s96
      %s118 = sphi 0, %s120
      %s121 = sphi 0, %s118
      %s122 = sphi 0, %s121
      %s138 = sphi 0, %s122
      %s144 = sphi 0, %s146
      %s147 = sphi 0, %s144
      %s148 = sphi 0, %s147
      %s164 = sphi 0, %s148
      %s172 = sphi 0, %s174
      %s175 = sphi 0, %s172
      %s176 = sphi 0, %s175
      %s192 = sphi 0, %s176
      %s200 = sphi 0, %s202
      %s203 = sphi 0, %s200
      %s204 = sphi 0, %s203
      %s220 = sphi 0, %s204
    $region4: #{tpu_custom_call.1} parent=1 // loop_header_branch
      %21 = sbr.rel (%p19) target = $region8
    $region5: #{tpu_custom_call.1} parent=1 // loop_body
      %s23 = ssub.s32 %s18, 1
      %s24 = ssub.s32 %s18, 2
      %s31 = sadd.s32 1, %s26
      %p32 = scmp.ge.s32.totalorder %s31, 3
      %s33 = scalar_select %p32, 0, %s31
      %s34 = sadd.s32 1, %s25
      %s35 = scalar_select %p32, %s34, %s25
      %p36 = scmp.ge.s32.totalorder %s35, 2
      %s37 = scalar_select %p36, 0, %s35
      %s38 = ssub.s32 %s25, %s37
      %p39 = scmp.eq.s32.totalorder %s38, 0
      %s41 = sadd.s32 %s40, 1
      %s42 = scalar_select %p39, %s40, %s41
      %p45 = pneg %p39
      %p46 = scmp.eq.s32.totalorder %s18, 5
      %p47 = por %p45, %p46
      %p48 = scmp.ne.s32.totalorder %s40, %s43
      %p49 = scmp.eq.s32.totalorder %s18, 0
      %p50 = por %p48, %p49
      %p51 = scmp.ne.s32.totalorder %s40, %s43
      %p52 = scmp.eq.s32.totalorder %s23, 5
      %p53 = por %p51, %p52
      %p54 = scmp.ne.s32.totalorder %s43, %s44
      %p55 = scmp.eq.s32.totalorder %s23, 0
      %p56 = por %p54, %p55
      %p57 = scmp.ne.s32.totalorder %s43, %s44
      %p58 = scmp.eq.s32.totalorder %s24, 5
      %p59 = por %p57, %p58
      %p61 = scmp.ne.s32.totalorder %s44, %s60
      %p62 = scmp.eq.s32.totalorder %s24, 0
      %p63 = por %p61, %p62
      %s64 = ssub.s32 %s25, %s37
      %p65 = scmp.eq.s32.totalorder %s64, 0
      %s67 = sadd.s32 %s66, 1
      %s68 = scalar_select %p65, %s66, %s67
      %p71 = pneg %p65
      %p72 = scmp.eq.s32.totalorder %s18, 5
      %p73 = por %p71, %p72
      %p74 = scmp.ne.s32.totalorder %s66, %s69
      %p75 = scmp.eq.s32.totalorder %s18, 0
      %p76 = por %p74, %p75
      %p77 = scmp.ne.s32.totalorder %s66, %s69
      %p78 = scmp.eq.s32.totalorder %s23, 5
      %p79 = por %p77, %p78
      %p80 = scmp.ne.s32.totalorder %s69, %s70
      %p81 = scmp.eq.s32.totalorder %s23, 0
      %p82 = por %p80, %p81
      %p83 = scmp.ne.s32.totalorder %s69, %s70
      %p84 = scmp.eq.s32.totalorder %s24, 5
      %p85 = por %p83, %p84
      %p87 = scmp.ne.s32.totalorder %s70, %s86
      %p88 = scmp.eq.s32.totalorder %s24, 0
      %p89 = por %p87, %p88
      %s90 = ssub.s32 %s26, %s33
      %p91 = scmp.eq.s32.totalorder %s90, 0
      %s93 = sadd.s32 %s92, 1
      %s94 = scalar_select %p91, %s92, %s93
      %p97 = pneg %p91
      %p98 = scmp.eq.s32.totalorder %s18, 5
      %p99 = por %p97, %p98
      %p100 = scmp.ne.s32.totalorder %s92, %s95
      %p101 = scmp.eq.s32.totalorder %s18, 0
      %p102 = por %p100, %p101
      %p103 = scmp.ne.s32.totalorder %s92, %s95
      %p104 = scmp.eq.s32.totalorder %s23, 5
      %p105 = por %p103, %p104
      %p106 = scmp.ne.s32.totalorder %s95, %s96
      %p107 = scmp.eq.s32.totalorder %s23, 0
      %p108 = por %p106, %p107
      %p109 = scmp.ne.s32.totalorder %s95, %s96
      %p110 = scmp.eq.s32.totalorder %s24, 5
      %p111 = por %p109, %p110
      %p113 = scmp.ne.s32.totalorder %s96, %s112
      %p114 = scmp.eq.s32.totalorder %s24, 0
      %p115 = por %p113, %p114
      %s116 = ssub.s32 %s26, %s33
      %p117 = scmp.eq.s32.totalorder %s116, 0
      %s119 = sadd.s32 %s118, 1
      %s120 = scalar_select %p117, %s118, %s119
      %p123 = pneg %p117
      %p124 = scmp.eq.s32.totalorder %s18, 5
      %p125 = por %p123, %p124
      %p126 = scmp.ne.s32.totalorder %s118, %s121
      %p127 = scmp.eq.s32.totalorder %s18, 0
      %p128 = por %p126, %p127
      %p129 = scmp.ne.s32.totalorder %s118, %s121
      %p130 = scmp.eq.s32.totalorder %s23, 5
      %p131 = por %p129, %p130
      %p132 = scmp.ne.s32.totalorder %s121, %s122
      %p133 = scmp.eq.s32.totalorder %s23, 0
      %p134 = por %p132, %p133
      %p135 = scmp.ne.s32.totalorder %s121, %s122
      %p136 = scmp.eq.s32.totalorder %s24, 5
      %p137 = por %p135, %p136
      %p139 = scmp.ne.s32.totalorder %s122, %s138
      %p140 = scmp.eq.s32.totalorder %s24, 0
      %p141 = por %p139, %p140
      %s142 = ssub.s32 %s26, %s33
      %p143 = scmp.eq.s32.totalorder %s142, 0
      %s145 = sadd.s32 %s144, 1
      %s146 = scalar_select %p143, %s144, %s145
      %p149 = pneg %p143
      %p150 = scmp.eq.s32.totalorder %s18, 5
      %p151 = por %p149, %p150
      %p152 = scmp.ne.s32.totalorder %s144, %s147
      %p153 = scmp.eq.s32.totalorder %s18, 0
      %p154 = por %p152, %p153
      %p155 = scmp.ne.s32.totalorder %s144, %s147
      %p156 = scmp.eq.s32.totalorder %s23, 5
      %p157 = por %p155, %p156
      %p158 = scmp.ne.s32.totalorder %s147, %s148
      %p159 = scmp.eq.s32.totalorder %s23, 0
      %p160 = por %p158, %p159
      %p161 = scmp.ne.s32.totalorder %s147, %s148
      %p162 = scmp.eq.s32.totalorder %s24, 5
      %p163 = por %p161, %p162
      %p165 = scmp.ne.s32.totalorder %s148, %s164
      %p166 = scmp.eq.s32.totalorder %s24, 0
      %p167 = por %p165, %p166
      %s168 = ssub.s32 %s25, %s37
      %s169 = ssub.s32 %s26, %s33
      %s170 = sor.u32 %s168, %s169
      %p171 = scmp.eq.s32.totalorder %s170, 0
      %s173 = sadd.s32 %s172, 1
      %s174 = scalar_select %p171, %s172, %s173
      %p177 = pneg %p171
      %p178 = scmp.eq.s32.totalorder %s18, 5
      %p179 = por %p177, %p178
      %p180 = scmp.ne.s32.totalorder %s172, %s175
      %p181 = scmp.eq.s32.totalorder %s18, 0
      %p182 = por %p180, %p181
      %p183 = scmp.ne.s32.totalorder %s172, %s175
      %p184 = scmp.eq.s32.totalorder %s23, 5
      %p185 = por %p183, %p184
      %p186 = scmp.ne.s32.totalorder %s175, %s176
      %p187 = scmp.eq.s32.totalorder %s23, 0
      %p188 = por %p186, %p187
      %p189 = scmp.ne.s32.totalorder %s175, %s176
      %p190 = scmp.eq.s32.totalorder %s24, 5
      %p191 = por %p189, %p190
      %p193 = scmp.ne.s32.totalorder %s176, %s192
      %p194 = scmp.eq.s32.totalorder %s24, 0
      %p195 = por %p193, %p194
      %s196 = ssub.s32 %s25, %s37
      %s197 = ssub.s32 %s26, %s33
      %s198 = sor.u32 %s196, %s197
      %p199 = scmp.eq.s32.totalorder %s198, 0
      %s201 = sadd.s32 %s200, 1
      %s202 = scalar_select %p199, %s200, %s201
      %p205 = pneg %p199
      %p206 = scmp.eq.s32.totalorder %s18, 5
      %p207 = por %p205, %p206
      %p208 = scmp.ne.s32.totalorder %s200, %s203
      %p209 = scmp.eq.s32.totalorder %s18, 0
      %p210 = por %p208, %p209
      %p211 = scmp.ne.s32.totalorder %s200, %s203
      %p212 = scmp.eq.s32.totalorder %s23, 5
      %p213 = por %p211, %p212
      %p214 = scmp.ne.s32.totalorder %s203, %s204
      %p215 = scmp.eq.s32.totalorder %s23, 0
      %p216 = por %p214, %p215
      %p217 = scmp.ne.s32.totalorder %s203, %s204
      %p218 = scmp.eq.s32.totalorder %s24, 5
      %p219 = por %p217, %p218
      %p221 = scmp.ne.s32.totalorder %s204, %s220
      %p222 = scmp.eq.s32.totalorder %s24, 0
      %p223 = por %p221, %p222
      %p224 = scmp.le.s32.totalorder 1, %s18
      %p225 = scmp.lt.s32.totalorder %s18, 7
      %p226 = pnand %p224, %p225
      %p227 = pneg %p226
      // Predicated region
      $region9: #{tpu_custom_call.1} parent=5 // pred_check
        _
      $region10: #{tpu_custom_call.1} parent=5 // pred_check_branch
        %229 = sbr.rel (%p226) target = $region12
      $region11: #{tpu_custom_call.1} parent=5 // pred_region
        %s230 = ssub.s32 %s18, 1
      $region12: #{tpu_custom_call.1} parent=5 // pred_fallthru
        _
      %p231 = scmp.lt.s32.totalorder %s18, 6
      // Predicated region
      $region13: #{tpu_custom_call.1} parent=5 // pred_check
        %p232 = pneg %p231
      $region14: #{tpu_custom_call.1} parent=5 // pred_check_branch
        %234 = sbr.rel (%p232) target = $region16
      $region15: #{tpu_custom_call.1} parent=5 // pred_region
        // Predicated region
        $region17: #{tpu_custom_call.1} parent=15 // pred_check
          %p235 = pneg %p50
        $region18: #{tpu_custom_call.1} parent=15 // pred_check_branch
          %237 = sbr.rel (%p235) target = $region20
        $region19: #{tpu_custom_call.1} parent=15 // pred_region
          %s238 = smul.u32 31, %s25
          %s239 = ssub.s32 32, %s238
          %p240 = scmp.lt.s32.totalorder %s239, 31
          %s241 = scalar_select %p240, %s239, 31
          %s242 = smul.u32 8, %s241
          %p243 = scmp.lt.s32.totalorder %s238, 31
          %s244 = scalar_select %p243, %s238, 31
          %s245 = smul.addr %s244, 8
          %s246 = scalar_lea.vmem %s0, %s245
          %s247 = smul.u32 31, %s25
          %s248 = ssub.s32 32, %s247
          %p249 = scmp.lt.s32.totalorder %s248, 31
          %s250 = scalar_select %p249, %s248, 31
          %s251 = smul.u32 8, %s250
        $region20: #{tpu_custom_call.1} parent=15 // pred_fallthru
          _
        // Predicated region
        $region21: #{tpu_custom_call.1} parent=15 // pred_check
          %p252 = pneg %p76
        $region22: #{tpu_custom_call.1} parent=15 // pred_check_branch
          %254 = sbr.rel (%p252) target = $region24
        $region23: #{tpu_custom_call.1} parent=15 // pred_region
          %s255 = smul.u32 31, %s25
          %s256 = ssub.s32 32, %s255
          %p257 = scmp.lt.s32.totalorder %s256, 31
          %s258 = scalar_select %p257, %s256, 31
          %s259 = smul.u32 8, %s258
          %p260 = scmp.lt.s32.totalorder %s255, 31
          %s261 = scalar_select %p260, %s255, 31
          %s262 = smul.addr %s261, 8
          %s263 = scalar_lea.vmem %s1, %s262
          %s264 = smul.u32 31, %s25
          %s265 = ssub.s32 32, %s264
          %p266 = scmp.lt.s32.totalorder %s265, 31
          %s267 = scalar_select %p266, %s265, 31
          %s268 = smul.u32 8, %s267
        $region24: #{tpu_custom_call.1} parent=15 // pred_fallthru
          _
        // Predicated region
        $region25: #{tpu_custom_call.1} parent=15 // pred_check
          %p269 = pneg %p102
        $region26: #{tpu_custom_call.1} parent=15 // pred_check_branch
          %271 = sbr.rel (%p269) target = $region28
        $region27: #{tpu_custom_call.1} parent=15 // pred_region
          %s272 = sand.u32 %s92, 1
          %s273 = sand.u32 %s92, 1
          %s274 = smul.addr %s273, 128
          %s275 = scalar_lea.vmem [#allocation2], %s274
          %s276 = smul.u32 2, %s26
          %s277 = smul.addr %s276, 8
          %s278 = scalar_lea.vmem %s2, %s277
          // Predicated region
          $region29: #{tpu_custom_call.1} parent=27 // pred_check
            _
          $region30: #{tpu_custom_call.1} parent=27 // pred_check_branch
            %280 = sbr.rel (0) target = $region32
          $region31: #{tpu_custom_call.1} parent=27 // pred_region
            // Predicated region
            $region33: #{tpu_custom_call.1} parent=31 // pred_check
              _
            $region34: #{tpu_custom_call.1} parent=31 // pred_check_branch
              %282 = sbr.rel (0) target = $region36
            $region35: #{tpu_custom_call.1} parent=31 // pred_region
              loop: start=0, step=1, limit=1
              $region37: #{tpu_custom_call.1} parent=35 // loop_pre_header
                _
              $region38: #{tpu_custom_call.1} parent=35 // loop_header
                %s284 = sphi 0, %s288
                %p285 = scmp.ge.s32.totalorder %s284, 1
                %s289 = sphi %s278, %s278
                %s290 = sphi %s275, %s275
              $region39: #{tpu_custom_call.1} parent=35 // loop_header_branch
                %287 = sbr.rel (%p285) target = $region43
              $region40: #{tpu_custom_call.1} parent=35 // loop_body
                %v291 = vld [vmem:[%s289] sm:$0xff]
                %292 = vst [vmem:[%s290] sm:$0xff] %v291
                %v293 = vld [vmem:[%s289 + $0x8] sm:$0xff]
                %294 = vst [vmem:[%s290 + $0x8] sm:$0xff] %v293
                %v295 = vld [vmem:[%s289 + $0x30] sm:$0xff]
                %296 = vst [vmem:[%s290 + $0x10] sm:$0xff] %v295
                %v297 = vld [vmem:[%s289 + $0x38] sm:$0xff]
                %298 = vst [vmem:[%s290 + $0x18] sm:$0xff] %v297
                %v299 = vld [vmem:[%s289 + $0x60] sm:$0xff]
                %300 = vst [vmem:[%s290 + $0x20] sm:$0xff] %v299
                %v301 = vld [vmem:[%s289 + $0x68] sm:$0xff]
                %302 = vst [vmem:[%s290 + $0x28] sm:$0xff] %v301
                %v303 = vld [vmem:[%s289 + $0x90] sm:$0xff]
                %304 = vst [vmem:[%s290 + $0x30] sm:$0xff] %v303
                %v305 = vld [vmem:[%s289 + $0x98] sm:$0xff]
                %306 = vst [vmem:[%s290 + $0x38] sm:$0xff] %v305
                %v307 = vld [vmem:[%s289 + $0xc0] sm:$0xff]
                %308 = vst [vmem:[%s290 + $0x40] sm:$0xff] %v307
                %v309 = vld [vmem:[%s289 + $0xc8] sm:$0xff]
                %310 = vst [vmem:[%s290 + $0x48] sm:$0xff] %v309
                %v311 = vld [vmem:[%s289 + $0xf0] sm:$0xff]
                %312 = vst [vmem:[%s290 + $0x50] sm:$0xff] %v311
                %v313 = vld [vmem:[%s289 + $0xf8] sm:$0xff]
                %314 = vst [vmem:[%s290 + $0x58] sm:$0xff] %v313
                %v315 = vld [vmem:[%s289 + $0x120] sm:$0xff]
                %316 = vst [vmem:[%s290 + $0x60] sm:$0xff] %v315
                %v317 = vld [vmem:[%s289 + $0x128] sm:$0xff]
                %318 = vst [vmem:[%s290 + $0x68] sm:$0xff] %v317
                %v319 = vld [vmem:[%s289 + $0x150] sm:$0xff]
                %320 = vst [vmem:[%s290 + $0x70] sm:$0xff] %v319
                %v321 = vld [vmem:[%s289 + $0x158] sm:$0xff]
                %322 = vst [vmem:[%s290 + $0x78] sm:$0xff] %v321
              $region41: #{tpu_custom_call.1} parent=35 // loop_footer
                %s288 = sadd.s32 1, %s284
              $region42: #{tpu_custom_call.1} parent=35 // loop_footer_branch
                %283 = sbr.rel target = $region38
              $region43: #{tpu_custom_call.1} parent=35 // loop_exit
                _
            $region36: #{tpu_custom_call.1} parent=31 // pred_fallthru
              _
            // Predicated region
            $region44: #{tpu_custom_call.1} parent=31 // pred_check
              _
            $region45: #{tpu_custom_call.1} parent=31 // pred_check_branch
              %324 = sbr.rel target = $region47
            $region46: #{tpu_custom_call.1} parent=31 // pred_region
              _
            $region47: #{tpu_custom_call.1} parent=31 // pred_fallthru
              _
          $region32: #{tpu_custom_call.1} parent=27 // pred_fallthru
            _
          %325 = vnop
        $region28: #{tpu_custom_call.1} parent=15 // pred_fallthru
          _
        // Predicated region
        $region48: #{tpu_custom_call.1} parent=15 // pred_check
          %p326 = pneg %p128
        $region49: #{tpu_custom_call.1} parent=15 // pred_check_branch
          %328 = sbr.rel (%p326) target = $region51
        $region50: #{tpu_custom_call.1} parent=15 // pred_region
          %s329 = sand.u32 %s118, 1
          %s330 = sand.u32 %s118, 1
          %s331 = smul.addr %s330, 64
          %s332 = scalar_lea.vmem [#allocation3], %s331
          %s333 = smul.u32 2, %s26
          %s334 = smul.addr %s333, 8
          %s335 = scalar_lea.vmem %s3, %s334
          // Predicated region
          $region52: #{tpu_custom_call.1} parent=50 // pred_check
            _
          $region53: #{tpu_custom_call.1} parent=50 // pred_check_branch
            %337 = sbr.rel (0) target = $region55
          $region54: #{tpu_custom_call.1} parent=50 // pred_region
            // Predicated region
            $region56: #{tpu_custom_call.1} parent=54 // pred_check
              _
            $region57: #{tpu_custom_call.1} parent=54 // pred_check_branch
              %339 = sbr.rel (0) target = $region59
            $region58: #{tpu_custom_call.1} parent=54 // pred_region
              loop: start=0, step=1, limit=1
              $region60: #{tpu_custom_call.1} parent=58 // loop_pre_header
                _
              $region61: #{tpu_custom_call.1} parent=58 // loop_header
                %s341 = sphi 0, %s345
                %p342 = scmp.ge.s32.totalorder %s341, 1
                %s346 = sphi %s335, %s335
                %s347 = sphi %s332, %s332
              $region62: #{tpu_custom_call.1} parent=58 // loop_header_branch
                %344 = sbr.rel (%p342) target = $region66
              $region63: #{tpu_custom_call.1} parent=58 // loop_body
                %v348 = vld [vmem:[%s346] sm:$0xff]
                %349 = vst [vmem:[%s347] sm:$0xff] %v348
                %v350 = vld [vmem:[%s346 + $0x8] sm:$0xff]
                %351 = vst [vmem:[%s347 + $0x8] sm:$0xff] %v350
                %v352 = vld [vmem:[%s346 + $0x30] sm:$0xff]
                %353 = vst [vmem:[%s347 + $0x10] sm:$0xff] %v352
                %v354 = vld [vmem:[%s346 + $0x38] sm:$0xff]
                %355 = vst [vmem:[%s347 + $0x18] sm:$0xff] %v354
                %v356 = vld [vmem:[%s346 + $0x60] sm:$0xff]
                %357 = vst [vmem:[%s347 + $0x20] sm:$0xff] %v356
                %v358 = vld [vmem:[%s346 + $0x68] sm:$0xff]
                %359 = vst [vmem:[%s347 + $0x28] sm:$0xff] %v358
                %v360 = vld [vmem:[%s346 + $0x90] sm:$0xff]
                %361 = vst [vmem:[%s347 + $0x30] sm:$0xff] %v360
                %v362 = vld [vmem:[%s346 + $0x98] sm:$0xff]
                %363 = vst [vmem:[%s347 + $0x38] sm:$0xff] %v362
              $region64: #{tpu_custom_call.1} parent=58 // loop_footer
                %s345 = sadd.s32 1, %s341
              $region65: #{tpu_custom_call.1} parent=58 // loop_footer_branch
                %340 = sbr.rel target = $region61
              $region66: #{tpu_custom_call.1} parent=58 // loop_exit
                _
            $region59: #{tpu_custom_call.1} parent=54 // pred_fallthru
              _
            // Predicated region
            $region67: #{tpu_custom_call.1} parent=54 // pred_check
              _
            $region68: #{tpu_custom_call.1} parent=54 // pred_check_branch
              %365 = sbr.rel target = $region70
            $region69: #{tpu_custom_call.1} parent=54 // pred_region
              _
            $region70: #{tpu_custom_call.1} parent=54 // pred_fallthru
              _
          $region55: #{tpu_custom_call.1} parent=50 // pred_fallthru
            _
          %366 = vnop
        $region51: #{tpu_custom_call.1} parent=15 // pred_fallthru
          _
        // Predicated region
        $region71: #{tpu_custom_call.1} parent=15 // pred_check
          %p367 = pneg %p154
        $region72: #{tpu_custom_call.1} parent=15 // pred_check_branch
          %369 = sbr.rel (%p367) target = $region74
        $region73: #{tpu_custom_call.1} parent=15 // pred_region
          %s370 = smul.u32 2, %s26
          %p371 = scmp.lt.s32.totalorder %s370, 5
          %s372 = scalar_select %p371, %s370, 5
          %s373 = scalar_lea.vmem %s4, %s372
          %s374 = smul.u32 2, %s26
        $region74: #{tpu_custom_call.1} parent=15 // pred_fallthru
          _
        // Predicated region
        $region75: #{tpu_custom_call.1} parent=15 // pred_check
          %p375 = pneg %p182
        $region76: #{tpu_custom_call.1} parent=15 // pred_check_branch
          %377 = sbr.rel (%p375) target = $region78
        $region77: #{tpu_custom_call.1} parent=15 // pred_region
          %s378 = sand.u32 %s172, 1
          %s379 = scalar_lea.sflag [#allocation5], %s378
          %s380 = sand.u32 %s172, 1
          %s381 = smul.addr %s380, 496
          %s382 = scalar_lea.vmem [#allocation4], %s381
          %s383 = smul.u32 31, %s25
          %s384 = smul.u32 2, %s26
          %s385 = ssub.s32 32, %s383
          %p386 = scmp.lt.s32.totalorder %s385, 31
          %s387 = scalar_select %p386, %s385, 31
          %s388 = smul.u32 8, %s387
          %s389 = smul.u32 %s388, 2
          %s390 = ssub.s32 496, %s389
          %s391 = sshll.u32 %s390, 4
          %392 = vsyncadd %s379, %s391
          %p393 = scmp.ne.s32.totalorder 0, %s389
          %s394 = smul.addr %s383, 6
          %s395 = sadd.s32 %s384, %s394
          %s396 = smul.addr %s395, 8
          %s397 = scalar_lea.hbm %s5, %s396
          %s398 = smul.u32 16, %s387
          %s399 = sshll.u32 %s397, 4
          %s400 = int_to_ptr.hbm [resolvable:$true] %s399
          %s401 = sshll.u32 %s382, 4
          %s402 = int_to_ptr.vmem [resolvable:$true] %s401
          %s403 = sshll.u32 %s398, 4
          %407 = dma.hbm_to_vmem [thread:$0]  (%p393), %s400, %s403, %s402, %s379, 768, 256, 16
        $region78: #{tpu_custom_call.1} parent=15 // pred_fallthru
          _
      $region16: #{tpu_custom_call.1} parent=5 // pred_fallthru
        _
      %p408 = scmp.le.s32.totalorder 1, %s18
      %p409 = scmp.lt.s32.totalorder %s18, 7
      %p410 = pnand %p408, %p409
      %p411 = pneg %p410
      // Predicated region
      $region79: #{tpu_custom_call.1} parent=5 // pred_check
        _
      $region80: #{tpu_custom_call.1} parent=5 // pred_check_branch
        %413 = sbr.rel (%p410) target = $region82
      $region81: #{tpu_custom_call.1} parent=5 // pred_region
        %s414 = ssub.s32 %s18, 1
        %s415 = sand.u32 %s95, 1
        %s416 = sand.u32 %s95, 1
        %s417 = smul.addr %s416, 128
        %s418 = scalar_lea.vmem [#allocation2], %s417
        // Predicated region
        $region83: #{tpu_custom_call.1} parent=81 // pred_check
          %p419 = pneg %p108
        $region84: #{tpu_custom_call.1} parent=81 // pred_check_branch
          %421 = sbr.rel (%p419) target = $region86
        $region85: #{tpu_custom_call.1} parent=81 // pred_region
          _
        $region86: #{tpu_custom_call.1} parent=81 // pred_fallthru
          _
        %s422 = sand.u32 %s121, 1
        %s423 = sand.u32 %s121, 1
        %s424 = smul.addr %s423, 64
        %s425 = scalar_lea.vmem [#allocation3], %s424
        // Predicated region
        $region87: #{tpu_custom_call.1} parent=81 // pred_check
          %p426 = pneg %p134
        $region88: #{tpu_custom_call.1} parent=81 // pred_check_branch
          %428 = sbr.rel (%p426) target = $region90
        $region89: #{tpu_custom_call.1} parent=81 // pred_region
          _
        $region90: #{tpu_custom_call.1} parent=81 // pred_fallthru
          _
        %s429 = sand.u32 %s175, 1
        %s430 = scalar_lea.sflag [#allocation5], %s429
        %s431 = sand.u32 %s175, 1
        %s432 = smul.addr %s431, 496
        %s433 = scalar_lea.vmem [#allocation4], %s432
        // Predicated region
        $region91: #{tpu_custom_call.1} parent=81 // pred_check
          %p434 = pneg %p188
        $region92: #{tpu_custom_call.1} parent=81 // pred_check_branch
          %436 = sbr.rel (%p434) target = $region94
        $region93: #{tpu_custom_call.1} parent=81 // pred_region
          %438 = dma.done %s430, 7936
        $region94: #{tpu_custom_call.1} parent=81 // pred_fallthru
          _
        %s439 = smul.u32 31, %s27
        %s440 = ssub.s32 32, %s439
        %p441 = scmp.lt.s32.totalorder %s440, 31
        %s442 = scalar_select %p441, %s440, 31
        %s443 = smul.u32 8, %s442
        %p444 = scmp.lt.s32.totalorder %s439, 31
        %s445 = scalar_select %p444, %s439, 31
        %s446 = smul.addr %s445, 8
        %s447 = scalar_lea.vmem %s0, %s446
        %p448 = pneg %p56
        %p449 = pneg %p53
        %s450 = smul.u32 31, %s27
        %s451 = ssub.s32 32, %s450
        %p452 = scmp.lt.s32.totalorder %s451, 31
        %s453 = scalar_select %p452, %s451, 31
        %s454 = smul.u32 8, %s453
        %p455 = scmp.lt.s32.totalorder %s450, 31
        %s456 = scalar_select %p455, %s450, 31
        %s457 = smul.addr %s456, 8
        %s458 = scalar_lea.vmem %s1, %s457
        %p459 = pneg %p82
        %p460 = pneg %p79
        %s461 = sand.u32 %s95, 1
        %s462 = sand.u32 %s95, 1
        %s463 = smul.addr %s462, 128
        %s464 = scalar_lea.vmem [#allocation2], %s463
        %p465 = pneg %p108
        %p466 = pneg %p105
        %s467 = sand.u32 %s121, 1
        %s468 = sand.u32 %s121, 1
        %s469 = smul.addr %s468, 64
        %s470 = scalar_lea.vmem [#allocation3], %s469
        %p471 = pneg %p134
        %p472 = pneg %p131
        %s473 = smul.u32 2, %s28
        %p474 = scmp.lt.s32.totalorder %s473, 5
        %s475 = scalar_select %p474, %s473, 5
        %s476 = scalar_lea.vmem %s4, %s475
        %p477 = pneg %p160
        %p478 = pneg %p157
        %s479 = sand.u32 %s175, 1
        %s480 = scalar_lea.sflag [#allocation5], %s479
        %s481 = sand.u32 %s175, 1
        %s482 = smul.addr %s481, 496
        %s483 = scalar_lea.vmem [#allocation4], %s482
        %p484 = pneg %p188
        %p485 = pneg %p185
        %p486 = pneg %p216
        %p487 = pneg %p213
        %s488 = sand.u32 %s203, 1
        %s489 = scalar_lea.sflag [#allocation6], %s488
        %s490 = sand.u32 %s203, 1
        %s491 = smul.addr %s490, 496
        %s492 = scalar_lea.vmem [#allocation7], %s491
        %s493 = smul.u32 31, %s27
        %s494 = ssub.s32 32, %s493
        %p495 = scmp.lt.s32.totalorder %s494, 31
        %s496 = scalar_select %p495, %s494, 31
        %s497 = smul.u32 8, %s496
        %p498 = scmp.lt.s32.totalorder %s493, 31
        %s499 = scalar_select %p498, %s493, 31
        %s500 = smul.addr %s499, 8
        %s501 = scalar_lea.vmem %s0, %s500
        %s502 = smul.u32 31, %s27
        %s503 = ssub.s32 32, %s502
        %p504 = scmp.lt.s32.totalorder %s503, 31
        %s505 = scalar_select %p504, %s503, 31
        %s506 = smul.u32 8, %s505
        %s507 = smul.u32 31, %s27
        %s508 = ssub.s32 32, %s507
        %p509 = scmp.lt.s32.totalorder %s508, 31
        %s510 = scalar_select %p509, %s508, 31
        %s511 = smul.u32 8, %s510
        %p512 = scmp.lt.s32.totalorder %s507, 31
        %s513 = scalar_select %p512, %s507, 31
        %s514 = smul.addr %s513, 8
        %s515 = scalar_lea.vmem %s1, %s514
        %s516 = smul.u32 31, %s27
        %s517 = ssub.s32 32, %s516
        %p518 = scmp.lt.s32.totalorder %s517, 31
        %s519 = scalar_select %p518, %s517, 31
        %s520 = smul.u32 8, %s519
        %s521 = smul.u32 2, %s28
        %s522 = smul.u32 2, %s28
        %s523 = smul.u32 2, %s28
        %p524 = scmp.lt.s32.totalorder %s523, 5
        %s525 = scalar_select %p524, %s523, 5
        %s526 = scalar_lea.vmem %s4, %s525
        %s527 = smul.u32 2, %s28
        %s528 = smul.u32 31, %s27
        %s529 = smul.u32 2, %s28
        %s530 = ssub.s32 32, %s528
        %p531 = scmp.lt.s32.totalorder %s530, 31
        %s532 = scalar_select %p531, %s530, 31
        %s533 = smul.u32 8, %s532
        %s534 = smul.u32 %s533, 2
        %s535 = smul.u32 31, %s27
        %s536 = smul.u32 2, %s28
        %s537 = ssub.s32 32, %s535
        %p538 = scmp.lt.s32.totalorder %s537, 31
        %s539 = scalar_select %p538, %s537, 31
        %s540 = smul.u32 8, %s539
        %s541 = smul.u32 %s540, 2
        %v542 = vld [vmem:[%s501] sm:$0xff]
        %v543 = vld [vmem:[%s501 + $0x8] sm:$0xff]
        %v544 = vld [vmem:[%s501 + $0x10] sm:$0xff]
        %v545 = vld [vmem:[%s501 + $0x18] sm:$0xff]
        %v546 = vld [vmem:[%s501 + $0x20] sm:$0xff]
        %v547 = vld [vmem:[%s501 + $0x28] sm:$0xff]
        %v548 = vld [vmem:[%s501 + $0x30] sm:$0xff]
        %v549 = vld [vmem:[%s501 + $0x38] sm:$0xff]
        %v550 = vld [vmem:[%s501 + $0x40] sm:$0xff]
        %v551 = vld [vmem:[%s501 + $0x48] sm:$0xff]
        %v552 = vld [vmem:[%s501 + $0x50] sm:$0xff]
        %v553 = vld [vmem:[%s501 + $0x58] sm:$0xff]
        %v554 = vld [vmem:[%s501 + $0x60] sm:$0xff]
        %v555 = vld [vmem:[%s501 + $0x68] sm:$0xff]
        %v556 = vld [vmem:[%s501 + $0x70] sm:$0xff]
        %v557 = vld [vmem:[%s501 + $0x78] sm:$0xff]
        %v558 = vld [vmem:[%s501 + $0x80] sm:$0xff]
        %v559 = vld [vmem:[%s501 + $0x88] sm:$0xff]
        %v560 = vld [vmem:[%s501 + $0x90] sm:$0xff]
        %v561 = vld [vmem:[%s501 + $0x98] sm:$0xff]
        %v562 = vld [vmem:[%s501 + $0xa0] sm:$0xff]
        %v563 = vld [vmem:[%s501 + $0xa8] sm:$0xff]
        %v564 = vld [vmem:[%s501 + $0xb0] sm:$0xff]
        %v565 = vld [vmem:[%s501 + $0xb8] sm:$0xff]
        %v566 = vld [vmem:[%s501 + $0xc0] sm:$0xff]
        %v567 = vld [vmem:[%s501 + $0xc8] sm:$0xff]
        %v568 = vld [vmem:[%s501 + $0xd0] sm:$0xff]
        %v569 = vld [vmem:[%s501 + $0xd8] sm:$0xff]
        %v570 = vld [vmem:[%s501 + $0xe0] sm:$0xff]
        %v571 = vld [vmem:[%s501 + $0xe8] sm:$0xff]
        %v572 = vld [vmem:[%s501 + $0xf0] sm:$0xff]
        %v573 = vld [vmem:[%s515] sm:$0xff]
        %v574 = vld [vmem:[%s515 + $0x8] sm:$0xff]
        %v575 = vld [vmem:[%s515 + $0x10] sm:$0xff]
        %v576 = vld [vmem:[%s515 + $0x18] sm:$0xff]
        %v577 = vld [vmem:[%s515 + $0x20] sm:$0xff]
        %v578 = vld [vmem:[%s515 + $0x28] sm:$0xff]
        %v579 = vld [vmem:[%s515 + $0x30] sm:$0xff]
        %v580 = vld [vmem:[%s515 + $0x38] sm:$0xff]
        %v581 = vld [vmem:[%s515 + $0x40] sm:$0xff]
        %v582 = vld [vmem:[%s515 + $0x48] sm:$0xff]
        %v583 = vld [vmem:[%s515 + $0x50] sm:$0xff]
        %v584 = vld [vmem:[%s515 + $0x58] sm:$0xff]
        %v585 = vld [vmem:[%s515 + $0x60] sm:$0xff]
        %v586 = vld [vmem:[%s515 + $0x68] sm:$0xff]
        %v587 = vld [vmem:[%s515 + $0x70] sm:$0xff]
        %v588 = vld [vmem:[%s515 + $0x78] sm:$0xff]
        %v589 = vld [vmem:[%s515 + $0x80] sm:$0xff]
        %v590 = vld [vmem:[%s515 + $0x88] sm:$0xff]
        %v591 = vld [vmem:[%s515 + $0x90] sm:$0xff]
        %v592 = vld [vmem:[%s515 + $0x98] sm:$0xff]
        %v593 = vld [vmem:[%s515 + $0xa0] sm:$0xff]
        %v594 = vld [vmem:[%s515 + $0xa8] sm:$0xff]
        %v595 = vld [vmem:[%s515 + $0xb0] sm:$0xff]
        %v596 = vld [vmem:[%s515 + $0xb8] sm:$0xff]
        %v597 = vld [vmem:[%s515 + $0xc0] sm:$0xff]
        %v598 = vld [vmem:[%s515 + $0xc8] sm:$0xff]
        %v599 = vld [vmem:[%s515 + $0xd0] sm:$0xff]
        %v600 = vld [vmem:[%s515 + $0xd8] sm:$0xff]
        %v601 = vld [vmem:[%s515 + $0xe0] sm:$0xff]
        %v602 = vld [vmem:[%s515 + $0xe8] sm:$0xff]
        %v603 = vld [vmem:[%s515 + $0xf0] sm:$0xff]
        %v604 = vld [vmem:[%s418] sm:$0xff]
        %v605 = vld [vmem:[%s418 + $0x8] sm:$0xff]
        %v606 = vld [vmem:[%s418 + $0x10] sm:$0xff]
        %v607 = vld [vmem:[%s418 + $0x18] sm:$0xff]
        %v608 = vld [vmem:[%s418 + $0x20] sm:$0xff]
        %v609 = vld [vmem:[%s418 + $0x28] sm:$0xff]
        %v610 = vld [vmem:[%s418 + $0x30] sm:$0xff]
        %v611 = vld [vmem:[%s418 + $0x38] sm:$0xff]
        %v612 = vld [vmem:[%s418 + $0x40] sm:$0xff]
        %v613 = vld [vmem:[%s418 + $0x48] sm:$0xff]
        %v614 = vld [vmem:[%s418 + $0x50] sm:$0xff]
        %v615 = vld [vmem:[%s418 + $0x58] sm:$0xff]
        %v616 = vld [vmem:[%s418 + $0x60] sm:$0xff]
        %v617 = vld [vmem:[%s418 + $0x68] sm:$0xff]
        %v618 = vld [vmem:[%s418 + $0x70] sm:$0xff]
        %v619 = vld [vmem:[%s418 + $0x78] sm:$0xff]
        %v620 = vld [vmem:[%s425] sm:$0xff]
        %v621 = vld [vmem:[%s425 + $0x8] sm:$0xff]
        %v622 = vld [vmem:[%s425 + $0x10] sm:$0xff]
        %v623 = vld [vmem:[%s425 + $0x18] sm:$0xff]
        %v624 = vld [vmem:[%s425 + $0x20] sm:$0xff]
        %v625 = vld [vmem:[%s425 + $0x28] sm:$0xff]
        %v626 = vld [vmem:[%s425 + $0x30] sm:$0xff]
        %v627 = vld [vmem:[%s425 + $0x38] sm:$0xff]
        %vm628 = vcmask 261120
        %v630 = vsel %vm628, %v573, 0
        %v633 = vsel %vm628, %v574, 0
        %v636 = vsel %vm628, %v575, 0
        %v639 = vsel %vm628, %v576, 0
        %v642 = vsel %vm628, %v577, 0
        %v645 = vsel %vm628, %v578, 0
        %v648 = vsel %vm628, %v579, 0
        %v651 = vsel %vm628, %v580, 0
        %v654 = vsel %vm628, %v581, 0
        %v657 = vsel %vm628, %v582, 0
        %v660 = vsel %vm628, %v583, 0
        %v663 = vsel %vm628, %v584, 0
        %v666 = vsel %vm628, %v585, 0
        %v669 = vsel %vm628, %v586, 0
        %v672 = vsel %vm628, %v587, 0
        %v675 = vsel %vm628, %v588, 0
        %v678 = vsel %vm628, %v589, 0
        %v681 = vsel %vm628, %v590, 0
        %v684 = vsel %vm628, %v591, 0
        %v687 = vsel %vm628, %v592, 0
        %v690 = vsel %vm628, %v593, 0
        %v693 = vsel %vm628, %v594, 0
        %v696 = vsel %vm628, %v595, 0
        %v699 = vsel %vm628, %v596, 0
        %v702 = vsel %vm628, %v597, 0
        %v705 = vsel %vm628, %v598, 0
        %v708 = vsel %vm628, %v599, 0
        %v711 = vsel %vm628, %v600, 0
        %v714 = vsel %vm628, %v601, 0
        %v717 = vsel %vm628, %v602, 0
        %v720 = vsel %vm628, %v603, 0
        %722 = vmatpush.msra.mxu0 0.0
        %723 = vmatpush.msra.mxu0 0.0
        %724 = vmatpush.msra.mxu0 0.0
        %725 = vmatpush.msra.mxu0 0.0
        %726 = vmatpush.msra.mxu0 0.0
        %727 = vmatpush.msra.mxu0 0.0
        %728 = vmatpush.msra.mxu0 0.0
        %729 = vmatpush.msra.mxu0 0.0
        %730 = vmatpush.msra.mxu0 0.0
        %731 = vmatpush.msra.mxu0 0.0
        %732 = vmatpush.msra.mxu0 0.0
        %733 = vmatpush.msra.mxu0 0.0
        %734 = vmatpush.msra.mxu0 %v626
        %735 = vmatpush.msra.mxu0 %v624
        %736 = vmatpush.msra.mxu0 %v622
        %737 = vmatpush.msra.mxu0 %v620
        %738 = vmatmul.f32.gmra.mxu0 %v630
        %v739 = vpop.f32.mrf.mxu0
        %v740 = vadd.f32 0.0, %v739
        %741 = vmatmul.f32.gmra.mxu0 %v633
        %v742 = vpop.f32.mrf.mxu0
        %v743 = vadd.f32 0.0, %v742
        %744 = vmatmul.f32.gmra.mxu0 %v636
        %v745 = vpop.f32.mrf.mxu0
        %v746 = vadd.f32 0.0, %v745
        %747 = vmatmul.f32.gmra.mxu0 %v639
        %v748 = vpop.f32.mrf.mxu0
        %v749 = vadd.f32 0.0, %v748
        %750 = vmatmul.f32.gmra.mxu0 %v642
        %v751 = vpop.f32.mrf.mxu0
        %v752 = vadd.f32 0.0, %v751
        %753 = vmatmul.f32.gmra.mxu0 %v645
        %v754 = vpop.f32.mrf.mxu0
        %v755 = vadd.f32 0.0, %v754
        %756 = vmatmul.f32.gmra.mxu0 %v648
        %v757 = vpop.f32.mrf.mxu0
        %v758 = vadd.f32 0.0, %v757
        %759 = vmatmul.f32.gmra.mxu0 %v651
        %v760 = vpop.f32.mrf.mxu0
        %v761 = vadd.f32 0.0, %v760
        %762 = vmatmul.f32.gmra.mxu0 %v654
        %v763 = vpop.f32.mrf.mxu0
        %v764 = vadd.f32 0.0, %v763
        %765 = vmatmul.f32.gmra.mxu0 %v657
        %v766 = vpop.f32.mrf.mxu0
        %v767 = vadd.f32 0.0, %v766
        %768 = vmatmul.f32.gmra.mxu0 %v660
        %v769 = vpop.f32.mrf.mxu0
        %v770 = vadd.f32 0.0, %v769
        %771 = vmatmul.f32.gmra.mxu0 %v663
        %v772 = vpop.f32.mrf.mxu0
        %v773 = vadd.f32 0.0, %v772
        %774 = vmatmul.f32.gmra.mxu0 %v666
        %v775 = vpop.f32.mrf.mxu0
        %v776 = vadd.f32 0.0, %v775
        %777 = vmatmul.f32.gmra.mxu0 %v669
        %v778 = vpop.f32.mrf.mxu0
        %v779 = vadd.f32 0.0, %v778
        %780 = vmatmul.f32.gmra.mxu0 %v672
        %v781 = vpop.f32.mrf.mxu0
        %v782 = vadd.f32 0.0, %v781
        %783 = vmatmul.f32.gmra.mxu0 %v675
        %v784 = vpop.f32.mrf.mxu0
        %v785 = vadd.f32 0.0, %v784
        %786 = vmatmul.f32.gmra.mxu0 %v678
        %v787 = vpop.f32.mrf.mxu0
        %v788 = vadd.f32 0.0, %v787
        %789 = vmatmul.f32.gmra.mxu0 %v681
        %v790 = vpop.f32.mrf.mxu0
        %v791 = vadd.f32 0.0, %v790
        %792 = vmatmul.f32.gmra.mxu0 %v684
        %v793 = vpop.f32.mrf.mxu0
        %v794 = vadd.f32 0.0, %v793
        %795 = vmatmul.f32.gmra.mxu0 %v687
        %v796 = vpop.f32.mrf.mxu0
        %v797 = vadd.f32 0.0, %v796
        %798 = vmatmul.f32.gmra.mxu0 %v690
        %v799 = vpop.f32.mrf.mxu0
        %v800 = vadd.f32 0.0, %v799
        %801 = vmatmul.f32.gmra.mxu0 %v693
        %v802 = vpop.f32.mrf.mxu0
        %v803 = vadd.f32 0.0, %v802
        %804 = vmatmul.f32.gmra.mxu0 %v696
        %v805 = vpop.f32.mrf.mxu0
        %v806 = vadd.f32 0.0, %v805
        %807 = vmatmul.f32.gmra.mxu0 %v699
        %v808 = vpop.f32.mrf.mxu0
        %v809 = vadd.f32 0.0, %v808
        %810 = vmatmul.f32.gmra.mxu0 %v702
        %v811 = vpop.f32.mrf.mxu0
        %v812 = vadd.f32 0.0, %v811
        %813 = vmatmul.f32.gmra.mxu0 %v705
        %v814 = vpop.f32.mrf.mxu0
        %v815 = vadd.f32 0.0, %v814
        %816 = vmatmul.f32.gmra.mxu0 %v708
        %v817 = vpop.f32.mrf.mxu0
        %v818 = vadd.f32 0.0, %v817
        %819 = vmatmul.f32.gmra.mxu0 %v711
        %v820 = vpop.f32.mrf.mxu0
        %v821 = vadd.f32 0.0, %v820
        %822 = vmatmul.f32.gmra.mxu0 %v714
        %v823 = vpop.f32.mrf.mxu0
        %v824 = vadd.f32 0.0, %v823
        %825 = vmatmul.f32.gmra.mxu0 %v717
        %v826 = vpop.f32.mrf.mxu0
        %v827 = vadd.f32 0.0, %v826
        %828 = vmatmul.f32.gmra.mxu0 %v720
        %v829 = vpop.f32.mrf.mxu0
        %v830 = vadd.f32 0.0, %v829
        %831 = vdwg.mxu0
        %832 = vmatpush.msra.mxu0 0.0
        %833 = vmatpush.msra.mxu0 0.0
        %834 = vmatpush.msra.mxu0 0.0
        %835 = vmatpush.msra.mxu0 0.0
        %836 = vmatpush.msra.mxu0 0.0
        %837 = vmatpush.msra.mxu0 0.0
        %838 = vmatpush.msra.mxu0 0.0
        %839 = vmatpush.msra.mxu0 0.0
        %840 = vmatpush.msra.mxu0 0.0
        %841 = vmatpush.msra.mxu0 0.0
        %842 = vmatpush.msra.mxu0 0.0
        %843 = vmatpush.msra.mxu0 0.0
        %844 = vmatpush.msra.mxu0 %v627
        %845 = vmatpush.msra.mxu0 %v625
        %846 = vmatpush.msra.mxu0 %v623
        %847 = vmatpush.msra.mxu0 %v621
        %848 = vmatmul.f32.gmra.mxu0 %v630
        %v849 = vpop.f32.mrf.mxu0
        %v850 = vadd.f32 0.0, %v849
        %851 = vmatmul.f32.gmra.mxu0 %v633
        %v852 = vpop.f32.mrf.mxu0
        %v853 = vadd.f32 0.0, %v852
        %854 = vmatmul.f32.gmra.mxu0 %v636
        %v855 = vpop.f32.mrf.mxu0
        %v856 = vadd.f32 0.0, %v855
        %857 = vmatmul.f32.gmra.mxu0 %v639
        %v858 = vpop.f32.mrf.mxu0
        %v859 = vadd.f32 0.0, %v858
        %860 = vmatmul.f32.gmra.mxu0 %v642
        %v861 = vpop.f32.mrf.mxu0
        %v862 = vadd.f32 0.0, %v861
        %863 = vmatmul.f32.gmra.mxu0 %v645
        %v864 = vpop.f32.mrf.mxu0
        %v865 = vadd.f32 0.0, %v864
        %866 = vmatmul.f32.gmra.mxu0 %v648
        %v867 = vpop.f32.mrf.mxu0
        %v868 = vadd.f32 0.0, %v867
        %869 = vmatmul.f32.gmra.mxu0 %v651
        %v870 = vpop.f32.mrf.mxu0
        %v871 = vadd.f32 0.0, %v870
        %872 = vmatmul.f32.gmra.mxu0 %v654
        %v873 = vpop.f32.mrf.mxu0
        %v874 = vadd.f32 0.0, %v873
        %875 = vmatmul.f32.gmra.mxu0 %v657
        %v876 = vpop.f32.mrf.mxu0
        %v877 = vadd.f32 0.0, %v876
        %878 = vmatmul.f32.gmra.mxu0 %v660
        %v879 = vpop.f32.mrf.mxu0
        %v880 = vadd.f32 0.0, %v879
        %881 = vmatmul.f32.gmra.mxu0 %v663
        %v882 = vpop.f32.mrf.mxu0
        %v883 = vadd.f32 0.0, %v882
        %884 = vmatmul.f32.gmra.mxu0 %v666
        %v885 = vpop.f32.mrf.mxu0
        %v886 = vadd.f32 0.0, %v885
        %887 = vmatmul.f32.gmra.mxu0 %v669
        %v888 = vpop.f32.mrf.mxu0
        %v889 = vadd.f32 0.0, %v888
        %890 = vmatmul.f32.gmra.mxu0 %v672
        %v891 = vpop.f32.mrf.mxu0
        %v892 = vadd.f32 0.0, %v891
        %893 = vmatmul.f32.gmra.mxu0 %v675
        %v894 = vpop.f32.mrf.mxu0
        %v895 = vadd.f32 0.0, %v894
        %896 = vmatmul.f32.gmra.mxu0 %v678
        %v897 = vpop.f32.mrf.mxu0
        %v898 = vadd.f32 0.0, %v897
        %899 = vmatmul.f32.gmra.mxu0 %v681
        %v900 = vpop.f32.mrf.mxu0
        %v901 = vadd.f32 0.0, %v900
        %902 = vmatmul.f32.gmra.mxu0 %v684
        %v903 = vpop.f32.mrf.mxu0
        %v904 = vadd.f32 0.0, %v903
        %905 = vmatmul.f32.gmra.mxu0 %v687
        %v906 = vpop.f32.mrf.mxu0
        %v907 = vadd.f32 0.0, %v906
        %908 = vmatmul.f32.gmra.mxu0 %v690
        %v909 = vpop.f32.mrf.mxu0
        %v910 = vadd.f32 0.0, %v909
        %911 = vmatmul.f32.gmra.mxu0 %v693
        %v912 = vpop.f32.mrf.mxu0
        %v913 = vadd.f32 0.0, %v912
        %914 = vmatmul.f32.gmra.mxu0 %v696
        %v915 = vpop.f32.mrf.mxu0
        %v916 = vadd.f32 0.0, %v915
        %917 = vmatmul.f32.gmra.mxu0 %v699
        %v918 = vpop.f32.mrf.mxu0
        %v919 = vadd.f32 0.0, %v918
        %920 = vmatmul.f32.gmra.mxu0 %v702
        %v921 = vpop.f32.mrf.mxu0
        %v922 = vadd.f32 0.0, %v921
        %923 = vmatmul.f32.gmra.mxu0 %v705
        %v924 = vpop.f32.mrf.mxu0
        %v925 = vadd.f32 0.0, %v924
        %926 = vmatmul.f32.gmra.mxu0 %v708
        %v927 = vpop.f32.mrf.mxu0
        %v928 = vadd.f32 0.0, %v927
        %929 = vmatmul.f32.gmra.mxu0 %v711
        %v930 = vpop.f32.mrf.mxu0
        %v931 = vadd.f32 0.0, %v930
        %932 = vmatmul.f32.gmra.mxu0 %v714
        %v933 = vpop.f32.mrf.mxu0
        %v934 = vadd.f32 0.0, %v933
        %935 = vmatmul.f32.gmra.mxu0 %v717
        %v936 = vpop.f32.mrf.mxu0
        %v937 = vadd.f32 0.0, %v936
        %938 = vmatmul.f32.gmra.mxu0 %v720
        %v939 = vpop.f32.mrf.mxu0
        %v940 = vadd.f32 0.0, %v939
        %941 = vdwg.mxu0
        %vm942 = vcmask 523264
        %v944 = vsel %vm942, %v542, 0
        %v947 = vsel %vm942, %v543, 0
        %v950 = vsel %vm942, %v544, 0
        %v953 = vsel %vm942, %v545, 0
        %v956 = vsel %vm942, %v546, 0
        %v959 = vsel %vm942, %v547, 0
        %v962 = vsel %vm942, %v548, 0
        %v965 = vsel %vm942, %v549, 0
        %v968 = vsel %vm942, %v550, 0
        %v971 = vsel %vm942, %v551, 0
        %v974 = vsel %vm942, %v552, 0
        %v977 = vsel %vm942, %v553, 0
        %v980 = vsel %vm942, %v554, 0
        %v983 = vsel %vm942, %v555, 0
        %v986 = vsel %vm942, %v556, 0
        %v989 = vsel %vm942, %v557, 0
        %v992 = vsel %vm942, %v558, 0
        %v995 = vsel %vm942, %v559, 0
        %v998 = vsel %vm942, %v560, 0
        %v1001 = vsel %vm942, %v561, 0
        %v1004 = vsel %vm942, %v562, 0
        %v1007 = vsel %vm942, %v563, 0
        %v1010 = vsel %vm942, %v564, 0
        %v1013 = vsel %vm942, %v565, 0
        %v1016 = vsel %vm942, %v566, 0
        %v1019 = vsel %vm942, %v567, 0
        %v1022 = vsel %vm942, %v568, 0
        %v1025 = vsel %vm942, %v569, 0
        %v1028 = vsel %vm942, %v570, 0
        %v1031 = vsel %vm942, %v571, 0
        %v1034 = vsel %vm942, %v572, 0
        %1036 = vmatpush.msra.mxu0 0.0
        %1037 = vmatpush.msra.mxu0 0.0
        %1038 = vmatpush.msra.mxu0 0.0
        %1039 = vmatpush.msra.mxu0 0.0
        %1040 = vmatpush.msra.mxu0 0.0
        %1041 = vmatpush.msra.mxu0 0.0
        %1042 = vmatpush.msra.mxu0 0.0
        %1043 = vmatpush.msra.mxu0 0.0
        %1044 = vmatpush.msra.mxu0 %v618
        %1045 = vmatpush.msra.mxu0 %v616
        %1046 = vmatpush.msra.mxu0 %v614
        %1047 = vmatpush.msra.mxu0 %v612
        %1048 = vmatpush.msra.mxu0 %v610
        %1049 = vmatpush.msra.mxu0 %v608
        %1050 = vmatpush.msra.mxu0 %v606
        %1051 = vmatpush.msra.mxu0 %v604
        %1052 = vmatmul.f32.gmra.mxu0 %v944
        %v1053 = vpop.f32.mrf.mxu0
        %v1054 = vadd.f32 %v740, %v1053
        %1055 = vmatmul.f32.gmra.mxu0 %v947
        %v1056 = vpop.f32.mrf.mxu0
        %v1057 = vadd.f32 %v743, %v1056
        %1058 = vmatmul.f32.gmra.mxu0 %v950
        %v1059 = vpop.f32.mrf.mxu0
        %v1060 = vadd.f32 %v746, %v1059
        %1061 = vmatmul.f32.gmra.mxu0 %v953
        %v1062 = vpop.f32.mrf.mxu0
        %v1063 = vadd.f32 %v749, %v1062
        %1064 = vmatmul.f32.gmra.mxu0 %v956
        %v1065 = vpop.f32.mrf.mxu0
        %v1066 = vadd.f32 %v752, %v1065
        %1067 = vmatmul.f32.gmra.mxu0 %v959
        %v1068 = vpop.f32.mrf.mxu0
        %v1069 = vadd.f32 %v755, %v1068
        %1070 = vmatmul.f32.gmra.mxu0 %v962
        %v1071 = vpop.f32.mrf.mxu0
        %v1072 = vadd.f32 %v758, %v1071
        %1073 = vmatmul.f32.gmra.mxu0 %v965
        %v1074 = vpop.f32.mrf.mxu0
        %v1075 = vadd.f32 %v761, %v1074
        %1076 = vmatmul.f32.gmra.mxu0 %v968
        %v1077 = vpop.f32.mrf.mxu0
        %v1078 = vadd.f32 %v764, %v1077
        %1079 = vmatmul.f32.gmra.mxu0 %v971
        %v1080 = vpop.f32.mrf.mxu0
        %v1081 = vadd.f32 %v767, %v1080
        %1082 = vmatmul.f32.gmra.mxu0 %v974
        %v1083 = vpop.f32.mrf.mxu0
        %v1084 = vadd.f32 %v770, %v1083
        %1085 = vmatmul.f32.gmra.mxu0 %v977
        %v1086 = vpop.f32.mrf.mxu0
        %v1087 = vadd.f32 %v773, %v1086
        %1088 = vmatmul.f32.gmra.mxu0 %v980
        %v1089 = vpop.f32.mrf.mxu0
        %v1090 = vadd.f32 %v776, %v1089
        %1091 = vmatmul.f32.gmra.mxu0 %v983
        %v1092 = vpop.f32.mrf.mxu0
        %v1093 = vadd.f32 %v779, %v1092
        %1094 = vmatmul.f32.gmra.mxu0 %v986
        %v1095 = vpop.f32.mrf.mxu0
        %v1096 = vadd.f32 %v782, %v1095
        %1097 = vmatmul.f32.gmra.mxu0 %v989
        %v1098 = vpop.f32.mrf.mxu0
        %v1099 = vadd.f32 %v785, %v1098
        %1100 = vmatmul.f32.gmra.mxu0 %v992
        %v1101 = vpop.f32.mrf.mxu0
        %v1102 = vadd.f32 %v788, %v1101
        %1103 = vmatmul.f32.gmra.mxu0 %v995
        %v1104 = vpop.f32.mrf.mxu0
        %v1105 = vadd.f32 %v791, %v1104
        %1106 = vmatmul.f32.gmra.mxu0 %v998
        %v1107 = vpop.f32.mrf.mxu0
        %v1108 = vadd.f32 %v794, %v1107
        %1109 = vmatmul.f32.gmra.mxu0 %v1001
        %v1110 = vpop.f32.mrf.mxu0
        %v1111 = vadd.f32 %v797, %v1110
        %1112 = vmatmul.f32.gmra.mxu0 %v1004
        %v1113 = vpop.f32.mrf.mxu0
        %v1114 = vadd.f32 %v800, %v1113
        %1115 = vmatmul.f32.gmra.mxu0 %v1007
        %v1116 = vpop.f32.mrf.mxu0
        %v1117 = vadd.f32 %v803, %v1116
        %1118 = vmatmul.f32.gmra.mxu0 %v1010
        %v1119 = vpop.f32.mrf.mxu0
        %v1120 = vadd.f32 %v806, %v1119
        %1121 = vmatmul.f32.gmra.mxu0 %v1013
        %v1122 = vpop.f32.mrf.mxu0
        %v1123 = vadd.f32 %v809, %v1122
        %1124 = vmatmul.f32.gmra.mxu0 %v1016
        %v1125 = vpop.f32.mrf.mxu0
        %v1126 = vadd.f32 %v812, %v1125
        %1127 = vmatmul.f32.gmra.mxu0 %v1019
        %v1128 = vpop.f32.mrf.mxu0
        %v1129 = vadd.f32 %v815, %v1128
        %1130 = vmatmul.f32.gmra.mxu0 %v1022
        %v1131 = vpop.f32.mrf.mxu0
        %v1132 = vadd.f32 %v818, %v1131
        %1133 = vmatmul.f32.gmra.mxu0 %v1025
        %v1134 = vpop.f32.mrf.mxu0
        %v1135 = vadd.f32 %v821, %v1134
        %1136 = vmatmul.f32.gmra.mxu0 %v1028
        %v1137 = vpop.f32.mrf.mxu0
        %v1138 = vadd.f32 %v824, %v1137
        %1139 = vmatmul.f32.gmra.mxu0 %v1031
        %v1140 = vpop.f32.mrf.mxu0
        %v1141 = vadd.f32 %v827, %v1140
        %1142 = vmatmul.f32.gmra.mxu0 %v1034
        %v1143 = vpop.f32.mrf.mxu0
        %v1144 = vadd.f32 %v830, %v1143
        %1145 = vdwg.mxu0
        %1146 = vmatpush.msra.mxu0 0.0
        %1147 = vmatpush.msra.mxu0 0.0
        %1148 = vmatpush.msra.mxu0 0.0
        %1149 = vmatpush.msra.mxu0 0.0
        %1150 = vmatpush.msra.mxu0 0.0
        %1151 = vmatpush.msra.mxu0 0.0
        %1152 = vmatpush.msra.mxu0 0.0
        %1153 = vmatpush.msra.mxu0 0.0
        %1154 = vmatpush.msra.mxu0 %v619
        %1155 = vmatpush.msra.mxu0 %v617
        %1156 = vmatpush.msra.mxu0 %v615
        %1157 = vmatpush.msra.mxu0 %v613
        %1158 = vmatpush.msra.mxu0 %v611
        %1159 = vmatpush.msra.mxu0 %v609
        %1160 = vmatpush.msra.mxu0 %v607
        %1161 = vmatpush.msra.mxu0 %v605
        %1162 = vmatmul.f32.gmra.mxu0 %v944
        %v1163 = vpop.f32.mrf.mxu0
        %v1164 = vadd.f32 %v850, %v1163
        %1165 = vmatmul.f32.gmra.mxu0 %v947
        %v1166 = vpop.f32.mrf.mxu0
        %v1167 = vadd.f32 %v853, %v1166
        %1168 = vmatmul.f32.gmra.mxu0 %v950
        %v1169 = vpop.f32.mrf.mxu0
        %v1170 = vadd.f32 %v856, %v1169
        %1171 = vmatmul.f32.gmra.mxu0 %v953
        %v1172 = vpop.f32.mrf.mxu0
        %v1173 = vadd.f32 %v859, %v1172
        %1174 = vmatmul.f32.gmra.mxu0 %v956
        %v1175 = vpop.f32.mrf.mxu0
        %v1176 = vadd.f32 %v862, %v1175
        %1177 = vmatmul.f32.gmra.mxu0 %v959
        %v1178 = vpop.f32.mrf.mxu0
        %v1179 = vadd.f32 %v865, %v1178
        %1180 = vmatmul.f32.gmra.mxu0 %v962
        %v1181 = vpop.f32.mrf.mxu0
        %v1182 = vadd.f32 %v868, %v1181
        %1183 = vmatmul.f32.gmra.mxu0 %v965
        %v1184 = vpop.f32.mrf.mxu0
        %v1185 = vadd.f32 %v871, %v1184
        %1186 = vmatmul.f32.gmra.mxu0 %v968
        %v1187 = vpop.f32.mrf.mxu0
        %v1188 = vadd.f32 %v874, %v1187
        %1189 = vmatmul.f32.gmra.mxu0 %v971
        %v1190 = vpop.f32.mrf.mxu0
        %v1191 = vadd.f32 %v877, %v1190
        %1192 = vmatmul.f32.gmra.mxu0 %v974
        %v1193 = vpop.f32.mrf.mxu0
        %v1194 = vadd.f32 %v880, %v1193
        %1195 = vmatmul.f32.gmra.mxu0 %v977
        %v1196 = vpop.f32.mrf.mxu0
        %v1197 = vadd.f32 %v883, %v1196
        %1198 = vmatmul.f32.gmra.mxu0 %v980
        %v1199 = vpop.f32.mrf.mxu0
        %v1200 = vadd.f32 %v886, %v1199
        %1201 = vmatmul.f32.gmra.mxu0 %v983
        %v1202 = vpop.f32.mrf.mxu0
        %v1203 = vadd.f32 %v889, %v1202
        %1204 = vmatmul.f32.gmra.mxu0 %v986
        %v1205 = vpop.f32.mrf.mxu0
        %v1206 = vadd.f32 %v892, %v1205
        %1207 = vmatmul.f32.gmra.mxu0 %v989
        %v1208 = vpop.f32.mrf.mxu0
        %v1209 = vadd.f32 %v895, %v1208
        %1210 = vmatmul.f32.gmra.mxu0 %v992
        %v1211 = vpop.f32.mrf.mxu0
        %v1212 = vadd.f32 %v898, %v1211
        %1213 = vmatmul.f32.gmra.mxu0 %v995
        %v1214 = vpop.f32.mrf.mxu0
        %v1215 = vadd.f32 %v901, %v1214
        %1216 = vmatmul.f32.gmra.mxu0 %v998
        %v1217 = vpop.f32.mrf.mxu0
        %v1218 = vadd.f32 %v904, %v1217
        %1219 = vmatmul.f32.gmra.mxu0 %v1001
        %v1220 = vpop.f32.mrf.mxu0
        %v1221 = vadd.f32 %v907, %v1220
        %1222 = vmatmul.f32.gmra.mxu0 %v1004
        %v1223 = vpop.f32.mrf.mxu0
        %v1224 = vadd.f32 %v910, %v1223
        %1225 = vmatmul.f32.gmra.mxu0 %v1007
        %v1226 = vpop.f32.mrf.mxu0
        %v1227 = vadd.f32 %v913, %v1226
        %1228 = vmatmul.f32.gmra.mxu0 %v1010
        %v1229 = vpop.f32.mrf.mxu0
        %v1230 = vadd.f32 %v916, %v1229
        %1231 = vmatmul.f32.gmra.mxu0 %v1013
        %v1232 = vpop.f32.mrf.mxu0
        %v1233 = vadd.f32 %v919, %v1232
        %1234 = vmatmul.f32.gmra.mxu0 %v1016
        %v1235 = vpop.f32.mrf.mxu0
        %v1236 = vadd.f32 %v922, %v1235
        %1237 = vmatmul.f32.gmra.mxu0 %v1019
        %v1238 = vpop.f32.mrf.mxu0
        %v1239 = vadd.f32 %v925, %v1238
        %1240 = vmatmul.f32.gmra.mxu0 %v1022
        %v1241 = vpop.f32.mrf.mxu0
        %v1242 = vadd.f32 %v928, %v1241
        %1243 = vmatmul.f32.gmra.mxu0 %v1025
        %v1244 = vpop.f32.mrf.mxu0
        %v1245 = vadd.f32 %v931, %v1244
        %1246 = vmatmul.f32.gmra.mxu0 %v1028
        %v1247 = vpop.f32.mrf.mxu0
        %v1248 = vadd.f32 %v934, %v1247
        %1249 = vmatmul.f32.gmra.mxu0 %v1031
        %v1250 = vpop.f32.mrf.mxu0
        %v1251 = vadd.f32 %v937, %v1250
        %1252 = vmatmul.f32.gmra.mxu0 %v1034
        %v1253 = vpop.f32.mrf.mxu0
        %v1254 = vadd.f32 %v940, %v1253
        %1255 = vdwg.mxu0
        %v1256 = vld [vmem:[%s526] sm:$0x3]
        %v1258 = vperm.slane %v1256, 0
        %v1259 = vperm.slane %v1256, 1
        %v1262 = vadd.f32 %v1054, %v1258
        %v1263 = vadd.f32 %v1164, %v1259
        %v1264 = vadd.f32 %v1057, %v1258
        %v1265 = vadd.f32 %v1167, %v1259
        %v1266 = vadd.f32 %v1060, %v1258
        %v1267 = vadd.f32 %v1170, %v1259
        %v1268 = vadd.f32 %v1063, %v1258
        %v1269 = vadd.f32 %v1173, %v1259
        %v1270 = vadd.f32 %v1066, %v1258
        %v1271 = vadd.f32 %v1176, %v1259
        %v1272 = vadd.f32 %v1069, %v1258
        %v1273 = vadd.f32 %v1179, %v1259
        %v1274 = vadd.f32 %v1072, %v1258
        %v1275 = vadd.f32 %v1182, %v1259
        %v1276 = vadd.f32 %v1075, %v1258
        %v1277 = vadd.f32 %v1185, %v1259
        %v1278 = vadd.f32 %v1078, %v1258
        %v1279 = vadd.f32 %v1188, %v1259
        %v1280 = vadd.f32 %v1081, %v1258
        %v1281 = vadd.f32 %v1191, %v1259
        %v1282 = vadd.f32 %v1084, %v1258
        %v1283 = vadd.f32 %v1194, %v1259
        %v1284 = vadd.f32 %v1087, %v1258
        %v1285 = vadd.f32 %v1197, %v1259
        %v1286 = vadd.f32 %v1090, %v1258
        %v1287 = vadd.f32 %v1200, %v1259
        %v1288 = vadd.f32 %v1093, %v1258
        %v1289 = vadd.f32 %v1203, %v1259
        %v1290 = vadd.f32 %v1096, %v1258
        %v1291 = vadd.f32 %v1206, %v1259
        %v1292 = vadd.f32 %v1099, %v1258
        %v1293 = vadd.f32 %v1209, %v1259
        %v1294 = vadd.f32 %v1102, %v1258
        %v1295 = vadd.f32 %v1212, %v1259
        %v1296 = vadd.f32 %v1105, %v1258
        %v1297 = vadd.f32 %v1215, %v1259
        %v1298 = vadd.f32 %v1108, %v1258
        %v1299 = vadd.f32 %v1218, %v1259
        %v1300 = vadd.f32 %v1111, %v1258
        %v1301 = vadd.f32 %v1221, %v1259
        %v1302 = vadd.f32 %v1114, %v1258
        %v1303 = vadd.f32 %v1224, %v1259
        %v1304 = vadd.f32 %v1117, %v1258
        %v1305 = vadd.f32 %v1227, %v1259
        %v1306 = vadd.f32 %v1120, %v1258
        %v1307 = vadd.f32 %v1230, %v1259
        %v1308 = vadd.f32 %v1123, %v1258
        %v1309 = vadd.f32 %v1233, %v1259
        %v1310 = vadd.f32 %v1126, %v1258
        %v1311 = vadd.f32 %v1236, %v1259
        %v1312 = vadd.f32 %v1129, %v1258
        %v1313 = vadd.f32 %v1239, %v1259
        %v1314 = vadd.f32 %v1132, %v1258
        %v1315 = vadd.f32 %v1242, %v1259
        %v1316 = vadd.f32 %v1135, %v1258
        %v1317 = vadd.f32 %v1245, %v1259
        %v1318 = vadd.f32 %v1138, %v1258
        %v1319 = vadd.f32 %v1248, %v1259
        %v1320 = vadd.f32 %v1141, %v1258
        %v1321 = vadd.f32 %v1251, %v1259
        %v1322 = vadd.f32 %v1144, %v1258
        %v1323 = vadd.f32 %v1254, %v1259
        %v1324 = vxor.u32 %v1262, 2147483648
        %v1325 = vxor.u32 %v1263, 2147483648
        %v1326 = vxor.u32 %v1264, 2147483648
        %v1327 = vxor.u32 %v1265, 2147483648
        %v1328 = vxor.u32 %v1266, 2147483648
        %v1329 = vxor.u32 %v1267, 2147483648
        %v1330 = vxor.u32 %v1268, 2147483648
        %v1331 = vxor.u32 %v1269, 2147483648
        %v1332 = vxor.u32 %v1270, 2147483648
        %v1333 = vxor.u32 %v1271, 2147483648
        %v1334 = vxor.u32 %v1272, 2147483648
        %v1335 = vxor.u32 %v1273, 2147483648
        %v1336 = vxor.u32 %v1274, 2147483648
        %v1337 = vxor.u32 %v1275, 2147483648
        %v1338 = vxor.u32 %v1276, 2147483648
        %v1339 = vxor.u32 %v1277, 2147483648
        %v1340 = vxor.u32 %v1278, 2147483648
        %v1341 = vxor.u32 %v1279, 2147483648
        %v1342 = vxor.u32 %v1280, 2147483648
        %v1343 = vxor.u32 %v1281, 2147483648
        %v1344 = vxor.u32 %v1282, 2147483648
        %v1345 = vxor.u32 %v1283, 2147483648
        %v1346 = vxor.u32 %v1284, 2147483648
        %v1347 = vxor.u32 %v1285, 2147483648
        %v1348 = vxor.u32 %v1286, 2147483648
        %v1349 = vxor.u32 %v1287, 2147483648
        %v1350 = vxor.u32 %v1288, 2147483648
        %v1351 = vxor.u32 %v1289, 2147483648
        %v1352 = vxor.u32 %v1290, 2147483648
        %v1353 = vxor.u32 %v1291, 2147483648
        %v1354 = vxor.u32 %v1292, 2147483648
        %v1355 = vxor.u32 %v1293, 2147483648
        %v1356 = vxor.u32 %v1294, 2147483648
        %v1357 = vxor.u32 %v1295, 2147483648
        %v1358 = vxor.u32 %v1296, 2147483648
        %v1359 = vxor.u32 %v1297, 2147483648
        %v1360 = vxor.u32 %v1298, 2147483648
        %v1361 = vxor.u32 %v1299, 2147483648
        %v1362 = vxor.u32 %v1300, 2147483648
        %v1363 = vxor.u32 %v1301, 2147483648
        %v1364 = vxor.u32 %v1302, 2147483648
        %v1365 = vxor.u32 %v1303, 2147483648
        %v1366 = vxor.u32 %v1304, 2147483648
        %v1367 = vxor.u32 %v1305, 2147483648
        %v1368 = vxor.u32 %v1306, 2147483648
        %v1369 = vxor.u32 %v1307, 2147483648
        %v1370 = vxor.u32 %v1308, 2147483648
        %v1371 = vxor.u32 %v1309, 2147483648
        %v1372 = vxor.u32 %v1310, 2147483648
        %v1373 = vxor.u32 %v1311, 2147483648
        %v1374 = vxor.u32 %v1312, 2147483648
        %v1375 = vxor.u32 %v1313, 2147483648
        %v1376 = vxor.u32 %v1314, 2147483648
        %v1377 = vxor.u32 %v1315, 2147483648
        %v1378 = vxor.u32 %v1316, 2147483648
        %v1379 = vxor.u32 %v1317, 2147483648
        %v1380 = vxor.u32 %v1318, 2147483648
        %v1381 = vxor.u32 %v1319, 2147483648
        %v1382 = vxor.u32 %v1320, 2147483648
        %v1383 = vxor.u32 %v1321, 2147483648
        %v1384 = vxor.u32 %v1322, 2147483648
        %v1385 = vxor.u32 %v1323, 2147483648
        %v1386 = vmul.f32 %v1324, 1.442695
        %v1387 = vpow.pop %v1386
        %v1388 = vmul.f32 %v1325, 1.442695
        %v1389 = vpow.pop %v1388
        %v1390 = vmul.f32 %v1326, 1.442695
        %v1391 = vpow.pop %v1390
        %v1392 = vmul.f32 %v1327, 1.442695
        %v1393 = vpow.pop %v1392
        %v1394 = vmul.f32 %v1328, 1.442695
        %v1395 = vpow.pop %v1394
        %v1396 = vmul.f32 %v1329, 1.442695
        %v1397 = vpow.pop %v1396
        %v1398 = vmul.f32 %v1330, 1.442695
        %v1399 = vpow.pop %v1398
        %v1400 = vmul.f32 %v1331, 1.442695
        %v1401 = vpow.pop %v1400
        %v1402 = vmul.f32 %v1332, 1.442695
        %v1403 = vpow.pop %v1402
        %v1404 = vmul.f32 %v1333, 1.442695
        %v1405 = vpow.pop %v1404
        %v1406 = vmul.f32 %v1334, 1.442695
        %v1407 = vpow.pop %v1406
        %v1408 = vmul.f32 %v1335, 1.442695
        %v1409 = vpow.pop %v1408
        %v1410 = vmul.f32 %v1336, 1.442695
        %v1411 = vpow.pop %v1410
        %v1412 = vmul.f32 %v1337, 1.442695
        %v1413 = vpow.pop %v1412
        %v1414 = vmul.f32 %v1338, 1.442695
        %v1415 = vpow.pop %v1414
        %v1416 = vmul.f32 %v1339, 1.442695
        %v1417 = vpow.pop %v1416
        %v1418 = vmul.f32 %v1340, 1.442695
        %v1419 = vpow.pop %v1418
        %v1420 = vmul.f32 %v1341, 1.442695
        %v1421 = vpow.pop %v1420
        %v1422 = vmul.f32 %v1342, 1.442695
        %v1423 = vpow.pop %v1422
        %v1424 = vmul.f32 %v1343, 1.442695
        %v1425 = vpow.pop %v1424
        %v1426 = vmul.f32 %v1344, 1.442695
        %v1427 = vpow.pop %v1426
        %v1428 = vmul.f32 %v1345, 1.442695
        %v1429 = vpow.pop %v1428
        %v1430 = vmul.f32 %v1346, 1.442695
        %v1431 = vpow.pop %v1430
        %v1432 = vmul.f32 %v1347, 1.442695
        %v1433 = vpow.pop %v1432
        %v1434 = vmul.f32 %v1348, 1.442695
        %v1435 = vpow.pop %v1434
        %v1436 = vmul.f32 %v1349, 1.442695
        %v1437 = vpow.pop %v1436
        %v1438 = vmul.f32 %v1350, 1.442695
        %v1439 = vpow.pop %v1438
        %v1440 = vmul.f32 %v1351, 1.442695
        %v1441 = vpow.pop %v1440
        %v1442 = vmul.f32 %v1352, 1.442695
        %v1443 = vpow.pop %v1442
        %v1444 = vmul.f32 %v1353, 1.442695
        %v1445 = vpow.pop %v1444
        %v1446 = vmul.f32 %v1354, 1.442695
        %v1447 = vpow.pop %v1446
        %v1448 = vmul.f32 %v1355, 1.442695
        %v1449 = vpow.pop %v1448
        %v1450 = vmul.f32 %v1356, 1.442695
        %v1451 = vpow.pop %v1450
        %v1452 = vmul.f32 %v1357, 1.442695
        %v1453 = vpow.pop %v1452
        %v1454 = vmul.f32 %v1358, 1.442695
        %v1455 = vpow.pop %v1454
        %v1456 = vmul.f32 %v1359, 1.442695
        %v1457 = vpow.pop %v1456
        %v1458 = vmul.f32 %v1360, 1.442695
        %v1459 = vpow.pop %v1458
        %v1460 = vmul.f32 %v1361, 1.442695
        %v1461 = vpow.pop %v1460
        %v1462 = vmul.f32 %v1362, 1.442695
        %v1463 = vpow.pop %v1462
        %v1464 = vmul.f32 %v1363, 1.442695
        %v1465 = vpow.pop %v1464
        %v1466 = vmul.f32 %v1364, 1.442695
        %v1467 = vpow.pop %v1466
        %v1468 = vmul.f32 %v1365, 1.442695
        %v1469 = vpow.pop %v1468
        %v1470 = vmul.f32 %v1366, 1.442695
        %v1471 = vpow.pop %v1470
        %v1472 = vmul.f32 %v1367, 1.442695
        %v1473 = vpow.pop %v1472
        %v1474 = vmul.f32 %v1368, 1.442695
        %v1475 = vpow.pop %v1474
        %v1476 = vmul.f32 %v1369, 1.442695
        %v1477 = vpow.pop %v1476
        %v1478 = vmul.f32 %v1370, 1.442695
        %v1479 = vpow.pop %v1478
        %v1480 = vmul.f32 %v1371, 1.442695
        %v1481 = vpow.pop %v1480
        %v1482 = vmul.f32 %v1372, 1.442695
        %v1483 = vpow.pop %v1482
        %v1484 = vmul.f32 %v1373, 1.442695
        %v1485 = vpow.pop %v1484
        %v1486 = vmul.f32 %v1374, 1.442695
        %v1487 = vpow.pop %v1486
        %v1488 = vmul.f32 %v1375, 1.442695
        %v1489 = vpow.pop %v1488
        %v1490 = vmul.f32 %v1376, 1.442695
        %v1491 = vpow.pop %v1490
        %v1492 = vmul.f32 %v1377, 1.442695
        %v1493 = vpow.pop %v1492
        %v1494 = vmul.f32 %v1378, 1.442695
        %v1495 = vpow.pop %v1494
        %v1496 = vmul.f32 %v1379, 1.442695
        %v1497 = vpow.pop %v1496
        %v1498 = vmul.f32 %v1380, 1.442695
        %v1499 = vpow.pop %v1498
        %v1500 = vmul.f32 %v1381, 1.442695
        %v1501 = vpow.pop %v1500
        %v1502 = vmul.f32 %v1382, 1.442695
        %v1503 = vpow.pop %v1502
        %v1504 = vmul.f32 %v1383, 1.442695
        %v1505 = vpow.pop %v1504
        %v1506 = vmul.f32 %v1384, 1.442695
        %v1507 = vpow.pop %v1506
        %v1508 = vmul.f32 %v1385, 1.442695
        %v1509 = vpow.pop %v1508
        %v1510 = vadd.f32 %v1387, 1.0
        %v1511 = vadd.f32 %v1389, 1.0
        %v1512 = vadd.f32 %v1391, 1.0
        %v1513 = vadd.f32 %v1393, 1.0
        %v1514 = vadd.f32 %v1395, 1.0
        %v1515 = vadd.f32 %v1397, 1.0
        %v1516 = vadd.f32 %v1399, 1.0
        %v1517 = vadd.f32 %v1401, 1.0
        %v1518 = vadd.f32 %v1403, 1.0
        %v1519 = vadd.f32 %v1405, 1.0
        %v1520 = vadd.f32 %v1407, 1.0
        %v1521 = vadd.f32 %v1409, 1.0
        %v1522 = vadd.f32 %v1411, 1.0
        %v1523 = vadd.f32 %v1413, 1.0
        %v1524 = vadd.f32 %v1415, 1.0
        %v1525 = vadd.f32 %v1417, 1.0
        %v1526 = vadd.f32 %v1419, 1.0
        %v1527 = vadd.f32 %v1421, 1.0
        %v1528 = vadd.f32 %v1423, 1.0
        %v1529 = vadd.f32 %v1425, 1.0
        %v1530 = vadd.f32 %v1427, 1.0
        %v1531 = vadd.f32 %v1429, 1.0
        %v1532 = vadd.f32 %v1431, 1.0
        %v1533 = vadd.f32 %v1433, 1.0
        %v1534 = vadd.f32 %v1435, 1.0
        %v1535 = vadd.f32 %v1437, 1.0
        %v1536 = vadd.f32 %v1439, 1.0
        %v1537 = vadd.f32 %v1441, 1.0
        %v1538 = vadd.f32 %v1443, 1.0
        %v1539 = vadd.f32 %v1445, 1.0
        %v1540 = vadd.f32 %v1447, 1.0
        %v1541 = vadd.f32 %v1449, 1.0
        %v1542 = vadd.f32 %v1451, 1.0
        %v1543 = vadd.f32 %v1453, 1.0
        %v1544 = vadd.f32 %v1455, 1.0
        %v1545 = vadd.f32 %v1457, 1.0
        %v1546 = vadd.f32 %v1459, 1.0
        %v1547 = vadd.f32 %v1461, 1.0
        %v1548 = vadd.f32 %v1463, 1.0
        %v1549 = vadd.f32 %v1465, 1.0
        %v1550 = vadd.f32 %v1467, 1.0
        %v1551 = vadd.f32 %v1469, 1.0
        %v1552 = vadd.f32 %v1471, 1.0
        %v1553 = vadd.f32 %v1473, 1.0
        %v1554 = vadd.f32 %v1475, 1.0
        %v1555 = vadd.f32 %v1477, 1.0
        %v1556 = vadd.f32 %v1479, 1.0
        %v1557 = vadd.f32 %v1481, 1.0
        %v1558 = vadd.f32 %v1483, 1.0
        %v1559 = vadd.f32 %v1485, 1.0
        %v1560 = vadd.f32 %v1487, 1.0
        %v1561 = vadd.f32 %v1489, 1.0
        %v1562 = vadd.f32 %v1491, 1.0
        %v1563 = vadd.f32 %v1493, 1.0
        %v1564 = vadd.f32 %v1495, 1.0
        %v1565 = vadd.f32 %v1497, 1.0
        %v1566 = vadd.f32 %v1499, 1.0
        %v1567 = vadd.f32 %v1501, 1.0
        %v1568 = vadd.f32 %v1503, 1.0
        %v1569 = vadd.f32 %v1505, 1.0
        %v1570 = vadd.f32 %v1507, 1.0
        %v1571 = vadd.f32 %v1509, 1.0
        %v1572 = vrcp.pop %v1510
        %v1573 = vmul.f32 %v1510, %v1572
        %v1574 = vsub.f32 1.0, %v1573
        %v1575 = vmul.f32 %v1572, %v1574
        %v1576 = vadd.f32 %v1572, %v1575
        %vm1577 = vweird.f32 %v1510
        %vm1578 = vweird.f32 %v1572
        %vm1579 = vmor %vm1577, %vm1578
        %v1580 = vsel %vm1579, %v1572, %v1576
        %v1581 = vand.u32 2147483647, %v1510
        %vm1582 = vcmp.eq.f32.partialorder %v1581, 8.507059e+37
        %v1583 = vand.u32 %v1510, 2147483648
        %v1584 = vor.u32 1.1754944e-38, %v1583
        %v1585 = vsel %vm1582, %v1584, %v1580
        %v1586 = vmul.f32 1.0, %v1585
        %v1587 = vrcp.pop %v1511
        %v1588 = vmul.f32 %v1511, %v1587
        %v1589 = vsub.f32 1.0, %v1588
        %v1590 = vmul.f32 %v1587, %v1589
        %v1591 = vadd.f32 %v1587, %v1590
        %vm1592 = vweird.f32 %v1511
        %vm1593 = vweird.f32 %v1587
        %vm1594 = vmor %vm1592, %vm1593
        %v1595 = vsel %vm1594, %v1587, %v1591
        %v1596 = vand.u32 2147483647, %v1511
        %vm1597 = vcmp.eq.f32.partialorder %v1596, 8.507059e+37
        %v1598 = vand.u32 %v1511, 2147483648
        %v1599 = vor.u32 1.1754944e-38, %v1598
        %v1600 = vsel %vm1597, %v1599, %v1595
        %v1601 = vmul.f32 1.0, %v1600
        %v1602 = vrcp.pop %v1512
        %v1603 = vmul.f32 %v1512, %v1602
        %v1604 = vsub.f32 1.0, %v1603
        %v1605 = vmul.f32 %v1602, %v1604
        %v1606 = vadd.f32 %v1602, %v1605
        %vm1607 = vweird.f32 %v1512
        %vm1608 = vweird.f32 %v1602
        %vm1609 = vmor %vm1607, %vm1608
        %v1610 = vsel %vm1609, %v1602, %v1606
        %v1611 = vand.u32 2147483647, %v1512
        %vm1612 = vcmp.eq.f32.partialorder %v1611, 8.507059e+37
        %v1613 = vand.u32 %v1512, 2147483648
        %v1614 = vor.u32 1.1754944e-38, %v1613
        %v1615 = vsel %vm1612, %v1614, %v1610
        %v1616 = vmul.f32 1.0, %v1615
        %v1617 = vrcp.pop %v1513
        %v1618 = vmul.f32 %v1513, %v1617
        %v1619 = vsub.f32 1.0, %v1618
        %v1620 = vmul.f32 %v1617, %v1619
        %v1621 = vadd.f32 %v1617, %v1620
        %vm1622 = vweird.f32 %v1513
        %vm1623 = vweird.f32 %v1617
        %vm1624 = vmor %vm1622, %vm1623
        %v1625 = vsel %vm1624, %v1617, %v1621
        %v1626 = vand.u32 2147483647, %v1513
        %vm1627 = vcmp.eq.f32.partialorder %v1626, 8.507059e+37
        %v1628 = vand.u32 %v1513, 2147483648
        %v1629 = vor.u32 1.1754944e-38, %v1628
        %v1630 = vsel %vm1627, %v1629, %v1625
        %v1631 = vmul.f32 1.0, %v1630
        %v1632 = vrcp.pop %v1514
        %v1633 = vmul.f32 %v1514, %v1632
        %v1634 = vsub.f32 1.0, %v1633
        %v1635 = vmul.f32 %v1632, %v1634
        %v1636 = vadd.f32 %v1632, %v1635
        %vm1637 = vweird.f32 %v1514
        %vm1638 = vweird.f32 %v1632
        %vm1639 = vmor %vm1637, %vm1638
        %v1640 = vsel %vm1639, %v1632, %v1636
        %v1641 = vand.u32 2147483647, %v1514
        %vm1642 = vcmp.eq.f32.partialorder %v1641, 8.507059e+37
        %v1643 = vand.u32 %v1514, 2147483648
        %v1644 = vor.u32 1.1754944e-38, %v1643
        %v1645 = vsel %vm1642, %v1644, %v1640
        %v1646 = vmul.f32 1.0, %v1645
        %v1647 = vrcp.pop %v1515
        %v1648 = vmul.f32 %v1515, %v1647
        %v1649 = vsub.f32 1.0, %v1648
        %v1650 = vmul.f32 %v1647, %v1649
        %v1651 = vadd.f32 %v1647, %v1650
        %vm1652 = vweird.f32 %v1515
        %vm1653 = vweird.f32 %v1647
        %vm1654 = vmor %vm1652, %vm1653
        %v1655 = vsel %vm1654, %v1647, %v1651
        %v1656 = vand.u32 2147483647, %v1515
        %vm1657 = vcmp.eq.f32.partialorder %v1656, 8.507059e+37
        %v1658 = vand.u32 %v1515, 2147483648
        %v1659 = vor.u32 1.1754944e-38, %v1658
        %v1660 = vsel %vm1657, %v1659, %v1655
        %v1661 = vmul.f32 1.0, %v1660
        %v1662 = vrcp.pop %v1516
        %v1663 = vmul.f32 %v1516, %v1662
        %v1664 = vsub.f32 1.0, %v1663
        %v1665 = vmul.f32 %v1662, %v1664
        %v1666 = vadd.f32 %v1662, %v1665
        %vm1667 = vweird.f32 %v1516
        %vm1668 = vweird.f32 %v1662
        %vm1669 = vmor %vm1667, %vm1668
        %v1670 = vsel %vm1669, %v1662, %v1666
        %v1671 = vand.u32 2147483647, %v1516
        %vm1672 = vcmp.eq.f32.partialorder %v1671, 8.507059e+37
        %v1673 = vand.u32 %v1516, 2147483648
        %v1674 = vor.u32 1.1754944e-38, %v1673
        %v1675 = vsel %vm1672, %v1674, %v1670
        %v1676 = vmul.f32 1.0, %v1675
        %v1677 = vrcp.pop %v1517
        %v1678 = vmul.f32 %v1517, %v1677
        %v1679 = vsub.f32 1.0, %v1678
        %v1680 = vmul.f32 %v1677, %v1679
        %v1681 = vadd.f32 %v1677, %v1680
        %vm1682 = vweird.f32 %v1517
        %vm1683 = vweird.f32 %v1677
        %vm1684 = vmor %vm1682, %vm1683
        %v1685 = vsel %vm1684, %v1677, %v1681
        %v1686 = vand.u32 2147483647, %v1517
        %vm1687 = vcmp.eq.f32.partialorder %v1686, 8.507059e+37
        %v1688 = vand.u32 %v1517, 2147483648
        %v1689 = vor.u32 1.1754944e-38, %v1688
        %v1690 = vsel %vm1687, %v1689, %v1685
        %v1691 = vmul.f32 1.0, %v1690
        %v1692 = vrcp.pop %v1518
        %v1693 = vmul.f32 %v1518, %v1692
        %v1694 = vsub.f32 1.0, %v1693
        %v1695 = vmul.f32 %v1692, %v1694
        %v1696 = vadd.f32 %v1692, %v1695
        %vm1697 = vweird.f32 %v1518
        %vm1698 = vweird.f32 %v1692
        %vm1699 = vmor %vm1697, %vm1698
        %v1700 = vsel %vm1699, %v1692, %v1696
        %v1701 = vand.u32 2147483647, %v1518
        %vm1702 = vcmp.eq.f32.partialorder %v1701, 8.507059e+37
        %v1703 = vand.u32 %v1518, 2147483648
        %v1704 = vor.u32 1.1754944e-38, %v1703
        %v1705 = vsel %vm1702, %v1704, %v1700
        %v1706 = vmul.f32 1.0, %v1705
        %v1707 = vrcp.pop %v1519
        %v1708 = vmul.f32 %v1519, %v1707
        %v1709 = vsub.f32 1.0, %v1708
        %v1710 = vmul.f32 %v1707, %v1709
        %v1711 = vadd.f32 %v1707, %v1710
        %vm1712 = vweird.f32 %v1519
        %vm1713 = vweird.f32 %v1707
        %vm1714 = vmor %vm1712, %vm1713
        %v1715 = vsel %vm1714, %v1707, %v1711
        %v1716 = vand.u32 2147483647, %v1519
        %vm1717 = vcmp.eq.f32.partialorder %v1716, 8.507059e+37
        %v1718 = vand.u32 %v1519, 2147483648
        %v1719 = vor.u32 1.1754944e-38, %v1718
        %v1720 = vsel %vm1717, %v1719, %v1715
        %v1721 = vmul.f32 1.0, %v1720
        %v1722 = vrcp.pop %v1520
        %v1723 = vmul.f32 %v1520, %v1722
        %v1724 = vsub.f32 1.0, %v1723
        %v1725 = vmul.f32 %v1722, %v1724
        %v1726 = vadd.f32 %v1722, %v1725
        %vm1727 = vweird.f32 %v1520
        %vm1728 = vweird.f32 %v1722
        %vm1729 = vmor %vm1727, %vm1728
        %v1730 = vsel %vm1729, %v1722, %v1726
        %v1731 = vand.u32 2147483647, %v1520
        %vm1732 = vcmp.eq.f32.partialorder %v1731, 8.507059e+37
        %v1733 = vand.u32 %v1520, 2147483648
        %v1734 = vor.u32 1.1754944e-38, %v1733
        %v1735 = vsel %vm1732, %v1734, %v1730
        %v1736 = vmul.f32 1.0, %v1735
        %v1737 = vrcp.pop %v1521
        %v1738 = vmul.f32 %v1521, %v1737
        %v1739 = vsub.f32 1.0, %v1738
        %v1740 = vmul.f32 %v1737, %v1739
        %v1741 = vadd.f32 %v1737, %v1740
        %vm1742 = vweird.f32 %v1521
        %vm1743 = vweird.f32 %v1737
        %vm1744 = vmor %vm1742, %vm1743
        %v1745 = vsel %vm1744, %v1737, %v1741
        %v1746 = vand.u32 2147483647, %v1521
        %vm1747 = vcmp.eq.f32.partialorder %v1746, 8.507059e+37
        %v1748 = vand.u32 %v1521, 2147483648
        %v1749 = vor.u32 1.1754944e-38, %v1748
        %v1750 = vsel %vm1747, %v1749, %v1745
        %v1751 = vmul.f32 1.0, %v1750
        %v1752 = vrcp.pop %v1522
        %v1753 = vmul.f32 %v1522, %v1752
        %v1754 = vsub.f32 1.0, %v1753
        %v1755 = vmul.f32 %v1752, %v1754
        %v1756 = vadd.f32 %v1752, %v1755
        %vm1757 = vweird.f32 %v1522
        %vm1758 = vweird.f32 %v1752
        %vm1759 = vmor %vm1757, %vm1758
        %v1760 = vsel %vm1759, %v1752, %v1756
        %v1761 = vand.u32 2147483647, %v1522
        %vm1762 = vcmp.eq.f32.partialorder %v1761, 8.507059e+37
        %v1763 = vand.u32 %v1522, 2147483648
        %v1764 = vor.u32 1.1754944e-38, %v1763
        %v1765 = vsel %vm1762, %v1764, %v1760
        %v1766 = vmul.f32 1.0, %v1765
        %v1767 = vrcp.pop %v1523
        %v1768 = vmul.f32 %v1523, %v1767
        %v1769 = vsub.f32 1.0, %v1768
        %v1770 = vmul.f32 %v1767, %v1769
        %v1771 = vadd.f32 %v1767, %v1770
        %vm1772 = vweird.f32 %v1523
        %vm1773 = vweird.f32 %v1767
        %vm1774 = vmor %vm1772, %vm1773
        %v1775 = vsel %vm1774, %v1767, %v1771
        %v1776 = vand.u32 2147483647, %v1523
        %vm1777 = vcmp.eq.f32.partialorder %v1776, 8.507059e+37
        %v1778 = vand.u32 %v1523, 2147483648
        %v1779 = vor.u32 1.1754944e-38, %v1778
        %v1780 = vsel %vm1777, %v1779, %v1775
        %v1781 = vmul.f32 1.0, %v1780
        %v1782 = vrcp.pop %v1524
        %v1783 = vmul.f32 %v1524, %v1782
        %v1784 = vsub.f32 1.0, %v1783
        %v1785 = vmul.f32 %v1782, %v1784
        %v1786 = vadd.f32 %v1782, %v1785
        %vm1787 = vweird.f32 %v1524
        %vm1788 = vweird.f32 %v1782
        %vm1789 = vmor %vm1787, %vm1788
        %v1790 = vsel %vm1789, %v1782, %v1786
        %v1791 = vand.u32 2147483647, %v1524
        %vm1792 = vcmp.eq.f32.partialorder %v1791, 8.507059e+37
        %v1793 = vand.u32 %v1524, 2147483648
        %v1794 = vor.u32 1.1754944e-38, %v1793
        %v1795 = vsel %vm1792, %v1794, %v1790
        %v1796 = vmul.f32 1.0, %v1795
        %v1797 = vrcp.pop %v1525
        %v1798 = vmul.f32 %v1525, %v1797
        %v1799 = vsub.f32 1.0, %v1798
        %v1800 = vmul.f32 %v1797, %v1799
        %v1801 = vadd.f32 %v1797, %v1800
        %vm1802 = vweird.f32 %v1525
        %vm1803 = vweird.f32 %v1797
        %vm1804 = vmor %vm1802, %vm1803
        %v1805 = vsel %vm1804, %v1797, %v1801
        %v1806 = vand.u32 2147483647, %v1525
        %vm1807 = vcmp.eq.f32.partialorder %v1806, 8.507059e+37
        %v1808 = vand.u32 %v1525, 2147483648
        %v1809 = vor.u32 1.1754944e-38, %v1808
        %v1810 = vsel %vm1807, %v1809, %v1805
        %v1811 = vmul.f32 1.0, %v1810
        %v1812 = vrcp.pop %v1526
        %v1813 = vmul.f32 %v1526, %v1812
        %v1814 = vsub.f32 1.0, %v1813
        %v1815 = vmul.f32 %v1812, %v1814
        %v1816 = vadd.f32 %v1812, %v1815
        %vm1817 = vweird.f32 %v1526
        %vm1818 = vweird.f32 %v1812
        %vm1819 = vmor %vm1817, %vm1818
        %v1820 = vsel %vm1819, %v1812, %v1816
        %v1821 = vand.u32 2147483647, %v1526
        %vm1822 = vcmp.eq.f32.partialorder %v1821, 8.507059e+37
        %v1823 = vand.u32 %v1526, 2147483648
        %v1824 = vor.u32 1.1754944e-38, %v1823
        %v1825 = vsel %vm1822, %v1824, %v1820
        %v1826 = vmul.f32 1.0, %v1825
        %v1827 = vrcp.pop %v1527
        %v1828 = vmul.f32 %v1527, %v1827
        %v1829 = vsub.f32 1.0, %v1828
        %v1830 = vmul.f32 %v1827, %v1829
        %v1831 = vadd.f32 %v1827, %v1830
        %vm1832 = vweird.f32 %v1527
        %vm1833 = vweird.f32 %v1827
        %vm1834 = vmor %vm1832, %vm1833
        %v1835 = vsel %vm1834, %v1827, %v1831
        %v1836 = vand.u32 2147483647, %v1527
        %vm1837 = vcmp.eq.f32.partialorder %v1836, 8.507059e+37
        %v1838 = vand.u32 %v1527, 2147483648
        %v1839 = vor.u32 1.1754944e-38, %v1838
        %v1840 = vsel %vm1837, %v1839, %v1835
        %v1841 = vmul.f32 1.0, %v1840
        %v1842 = vrcp.pop %v1528
        %v1843 = vmul.f32 %v1528, %v1842
        %v1844 = vsub.f32 1.0, %v1843
        %v1845 = vmul.f32 %v1842, %v1844
        %v1846 = vadd.f32 %v1842, %v1845
        %vm1847 = vweird.f32 %v1528
        %vm1848 = vweird.f32 %v1842
        %vm1849 = vmor %vm1847, %vm1848
        %v1850 = vsel %vm1849, %v1842, %v1846
        %v1851 = vand.u32 2147483647, %v1528
        %vm1852 = vcmp.eq.f32.partialorder %v1851, 8.507059e+37
        %v1853 = vand.u32 %v1528, 2147483648
        %v1854 = vor.u32 1.1754944e-38, %v1853
        %v1855 = vsel %vm1852, %v1854, %v1850
        %v1856 = vmul.f32 1.0, %v1855
        %v1857 = vrcp.pop %v1529
        %v1858 = vmul.f32 %v1529, %v1857
        %v1859 = vsub.f32 1.0, %v1858
        %v1860 = vmul.f32 %v1857, %v1859
        %v1861 = vadd.f32 %v1857, %v1860
        %vm1862 = vweird.f32 %v1529
        %vm1863 = vweird.f32 %v1857
        %vm1864 = vmor %vm1862, %vm1863
        %v1865 = vsel %vm1864, %v1857, %v1861
        %v1866 = vand.u32 2147483647, %v1529
        %vm1867 = vcmp.eq.f32.partialorder %v1866, 8.507059e+37
        %v1868 = vand.u32 %v1529, 2147483648
        %v1869 = vor.u32 1.1754944e-38, %v1868
        %v1870 = vsel %vm1867, %v1869, %v1865
        %v1871 = vmul.f32 1.0, %v1870
        %v1872 = vrcp.pop %v1530
        %v1873 = vmul.f32 %v1530, %v1872
        %v1874 = vsub.f32 1.0, %v1873
        %v1875 = vmul.f32 %v1872, %v1874
        %v1876 = vadd.f32 %v1872, %v1875
        %vm1877 = vweird.f32 %v1530
        %vm1878 = vweird.f32 %v1872
        %vm1879 = vmor %vm1877, %vm1878
        %v1880 = vsel %vm1879, %v1872, %v1876
        %v1881 = vand.u32 2147483647, %v1530
        %vm1882 = vcmp.eq.f32.partialorder %v1881, 8.507059e+37
        %v1883 = vand.u32 %v1530, 2147483648
        %v1884 = vor.u32 1.1754944e-38, %v1883
        %v1885 = vsel %vm1882, %v1884, %v1880
        %v1886 = vmul.f32 1.0, %v1885
        %v1887 = vrcp.pop %v1531
        %v1888 = vmul.f32 %v1531, %v1887
        %v1889 = vsub.f32 1.0, %v1888
        %v1890 = vmul.f32 %v1887, %v1889
        %v1891 = vadd.f32 %v1887, %v1890
        %vm1892 = vweird.f32 %v1531
        %vm1893 = vweird.f32 %v1887
        %vm1894 = vmor %vm1892, %vm1893
        %v1895 = vsel %vm1894, %v1887, %v1891
        %v1896 = vand.u32 2147483647, %v1531
        %vm1897 = vcmp.eq.f32.partialorder %v1896, 8.507059e+37
        %v1898 = vand.u32 %v1531, 2147483648
        %v1899 = vor.u32 1.1754944e-38, %v1898
        %v1900 = vsel %vm1897, %v1899, %v1895
        %v1901 = vmul.f32 1.0, %v1900
        %v1902 = vrcp.pop %v1532
        %v1903 = vmul.f32 %v1532, %v1902
        %v1904 = vsub.f32 1.0, %v1903
        %v1905 = vmul.f32 %v1902, %v1904
        %v1906 = vadd.f32 %v1902, %v1905
        %vm1907 = vweird.f32 %v1532
        %vm1908 = vweird.f32 %v1902
        %vm1909 = vmor %vm1907, %vm1908
        %v1910 = vsel %vm1909, %v1902, %v1906
        %v1911 = vand.u32 2147483647, %v1532
        %vm1912 = vcmp.eq.f32.partialorder %v1911, 8.507059e+37
        %v1913 = vand.u32 %v1532, 2147483648
        %v1914 = vor.u32 1.1754944e-38, %v1913
        %v1915 = vsel %vm1912, %v1914, %v1910
        %v1916 = vmul.f32 1.0, %v1915
        %v1917 = vrcp.pop %v1533
        %v1918 = vmul.f32 %v1533, %v1917
        %v1919 = vsub.f32 1.0, %v1918
        %v1920 = vmul.f32 %v1917, %v1919
        %v1921 = vadd.f32 %v1917, %v1920
        %vm1922 = vweird.f32 %v1533
        %vm1923 = vweird.f32 %v1917
        %vm1924 = vmor %vm1922, %vm1923
        %v1925 = vsel %vm1924, %v1917, %v1921
        %v1926 = vand.u32 2147483647, %v1533
        %vm1927 = vcmp.eq.f32.partialorder %v1926, 8.507059e+37
        %v1928 = vand.u32 %v1533, 2147483648
        %v1929 = vor.u32 1.1754944e-38, %v1928
        %v1930 = vsel %vm1927, %v1929, %v1925
        %v1931 = vmul.f32 1.0, %v1930
        %v1932 = vrcp.pop %v1534
        %v1933 = vmul.f32 %v1534, %v1932
        %v1934 = vsub.f32 1.0, %v1933
        %v1935 = vmul.f32 %v1932, %v1934
        %v1936 = vadd.f32 %v1932, %v1935
        %vm1937 = vweird.f32 %v1534
        %vm1938 = vweird.f32 %v1932
        %vm1939 = vmor %vm1937, %vm1938
        %v1940 = vsel %vm1939, %v1932, %v1936
        %v1941 = vand.u32 2147483647, %v1534
        %vm1942 = vcmp.eq.f32.partialorder %v1941, 8.507059e+37
        %v1943 = vand.u32 %v1534, 2147483648
        %v1944 = vor.u32 1.1754944e-38, %v1943
        %v1945 = vsel %vm1942, %v1944, %v1940
        %v1946 = vmul.f32 1.0, %v1945
        %v1947 = vrcp.pop %v1535
        %v1948 = vmul.f32 %v1535, %v1947
        %v1949 = vsub.f32 1.0, %v1948
        %v1950 = vmul.f32 %v1947, %v1949
        %v1951 = vadd.f32 %v1947, %v1950
        %vm1952 = vweird.f32 %v1535
        %vm1953 = vweird.f32 %v1947
        %vm1954 = vmor %vm1952, %vm1953
        %v1955 = vsel %vm1954, %v1947, %v1951
        %v1956 = vand.u32 2147483647, %v1535
        %vm1957 = vcmp.eq.f32.partialorder %v1956, 8.507059e+37
        %v1958 = vand.u32 %v1535, 2147483648
        %v1959 = vor.u32 1.1754944e-38, %v1958
        %v1960 = vsel %vm1957, %v1959, %v1955
        %v1961 = vmul.f32 1.0, %v1960
        %v1962 = vrcp.pop %v1536
        %v1963 = vmul.f32 %v1536, %v1962
        %v1964 = vsub.f32 1.0, %v1963
        %v1965 = vmul.f32 %v1962, %v1964
        %v1966 = vadd.f32 %v1962, %v1965
        %vm1967 = vweird.f32 %v1536
        %vm1968 = vweird.f32 %v1962
        %vm1969 = vmor %vm1967, %vm1968
        %v1970 = vsel %vm1969, %v1962, %v1966
        %v1971 = vand.u32 2147483647, %v1536
        %vm1972 = vcmp.eq.f32.partialorder %v1971, 8.507059e+37
        %v1973 = vand.u32 %v1536, 2147483648
        %v1974 = vor.u32 1.1754944e-38, %v1973
        %v1975 = vsel %vm1972, %v1974, %v1970
        %v1976 = vmul.f32 1.0, %v1975
        %v1977 = vrcp.pop %v1537
        %v1978 = vmul.f32 %v1537, %v1977
        %v1979 = vsub.f32 1.0, %v1978
        %v1980 = vmul.f32 %v1977, %v1979
        %v1981 = vadd.f32 %v1977, %v1980
        %vm1982 = vweird.f32 %v1537
        %vm1983 = vweird.f32 %v1977
        %vm1984 = vmor %vm1982, %vm1983
        %v1985 = vsel %vm1984, %v1977, %v1981
        %v1986 = vand.u32 2147483647, %v1537
        %vm1987 = vcmp.eq.f32.partialorder %v1986, 8.507059e+37
        %v1988 = vand.u32 %v1537, 2147483648
        %v1989 = vor.u32 1.1754944e-38, %v1988
        %v1990 = vsel %vm1987, %v1989, %v1985
        %v1991 = vmul.f32 1.0, %v1990
        %v1992 = vrcp.pop %v1538
        %v1993 = vmul.f32 %v1538, %v1992
        %v1994 = vsub.f32 1.0, %v1993
        %v1995 = vmul.f32 %v1992, %v1994
        %v1996 = vadd.f32 %v1992, %v1995
        %vm1997 = vweird.f32 %v1538
        %vm1998 = vweird.f32 %v1992
        %vm1999 = vmor %vm1997, %vm1998
        %v2000 = vsel %vm1999, %v1992, %v1996
        %v2001 = vand.u32 2147483647, %v1538
        %vm2002 = vcmp.eq.f32.partialorder %v2001, 8.507059e+37
        %v2003 = vand.u32 %v1538, 2147483648
        %v2004 = vor.u32 1.1754944e-38, %v2003
        %v2005 = vsel %vm2002, %v2004, %v2000
        %v2006 = vmul.f32 1.0, %v2005
        %v2007 = vrcp.pop %v1539
        %v2008 = vmul.f32 %v1539, %v2007
        %v2009 = vsub.f32 1.0, %v2008
        %v2010 = vmul.f32 %v2007, %v2009
        %v2011 = vadd.f32 %v2007, %v2010
        %vm2012 = vweird.f32 %v1539
        %vm2013 = vweird.f32 %v2007
        %vm2014 = vmor %vm2012, %vm2013
        %v2015 = vsel %vm2014, %v2007, %v2011
        %v2016 = vand.u32 2147483647, %v1539
        %vm2017 = vcmp.eq.f32.partialorder %v2016, 8.507059e+37
        %v2018 = vand.u32 %v1539, 2147483648
        %v2019 = vor.u32 1.1754944e-38, %v2018
        %v2020 = vsel %vm2017, %v2019, %v2015
        %v2021 = vmul.f32 1.0, %v2020
        %v2022 = vrcp.pop %v1540
        %v2023 = vmul.f32 %v1540, %v2022
        %v2024 = vsub.f32 1.0, %v2023
        %v2025 = vmul.f32 %v2022, %v2024
        %v2026 = vadd.f32 %v2022, %v2025
        %vm2027 = vweird.f32 %v1540
        %vm2028 = vweird.f32 %v2022
        %vm2029 = vmor %vm2027, %vm2028
        %v2030 = vsel %vm2029, %v2022, %v2026
        %v2031 = vand.u32 2147483647, %v1540
        %vm2032 = vcmp.eq.f32.partialorder %v2031, 8.507059e+37
        %v2033 = vand.u32 %v1540, 2147483648
        %v2034 = vor.u32 1.1754944e-38, %v2033
        %v2035 = vsel %vm2032, %v2034, %v2030
        %v2036 = vmul.f32 1.0, %v2035
        %v2037 = vrcp.pop %v1541
        %v2038 = vmul.f32 %v1541, %v2037
        %v2039 = vsub.f32 1.0, %v2038
        %v2040 = vmul.f32 %v2037, %v2039
        %v2041 = vadd.f32 %v2037, %v2040
        %vm2042 = vweird.f32 %v1541
        %vm2043 = vweird.f32 %v2037
        %vm2044 = vmor %vm2042, %vm2043
        %v2045 = vsel %vm2044, %v2037, %v2041
        %v2046 = vand.u32 2147483647, %v1541
        %vm2047 = vcmp.eq.f32.partialorder %v2046, 8.507059e+37
        %v2048 = vand.u32 %v1541, 2147483648
        %v2049 = vor.u32 1.1754944e-38, %v2048
        %v2050 = vsel %vm2047, %v2049, %v2045
        %v2051 = vmul.f32 1.0, %v2050
        %v2052 = vrcp.pop %v1542
        %v2053 = vmul.f32 %v1542, %v2052
        %v2054 = vsub.f32 1.0, %v2053
        %v2055 = vmul.f32 %v2052, %v2054
        %v2056 = vadd.f32 %v2052, %v2055
        %vm2057 = vweird.f32 %v1542
        %vm2058 = vweird.f32 %v2052
        %vm2059 = vmor %vm2057, %vm2058
        %v2060 = vsel %vm2059, %v2052, %v2056
        %v2061 = vand.u32 2147483647, %v1542
        %vm2062 = vcmp.eq.f32.partialorder %v2061, 8.507059e+37
        %v2063 = vand.u32 %v1542, 2147483648
        %v2064 = vor.u32 1.1754944e-38, %v2063
        %v2065 = vsel %vm2062, %v2064, %v2060
        %v2066 = vmul.f32 1.0, %v2065
        %v2067 = vrcp.pop %v1543
        %v2068 = vmul.f32 %v1543, %v2067
        %v2069 = vsub.f32 1.0, %v2068
        %v2070 = vmul.f32 %v2067, %v2069
        %v2071 = vadd.f32 %v2067, %v2070
        %vm2072 = vweird.f32 %v1543
        %vm2073 = vweird.f32 %v2067
        %vm2074 = vmor %vm2072, %vm2073
        %v2075 = vsel %vm2074, %v2067, %v2071
        %v2076 = vand.u32 2147483647, %v1543
        %vm2077 = vcmp.eq.f32.partialorder %v2076, 8.507059e+37
        %v2078 = vand.u32 %v1543, 2147483648
        %v2079 = vor.u32 1.1754944e-38, %v2078
        %v2080 = vsel %vm2077, %v2079, %v2075
        %v2081 = vmul.f32 1.0, %v2080
        %v2082 = vrcp.pop %v1544
        %v2083 = vmul.f32 %v1544, %v2082
        %v2084 = vsub.f32 1.0, %v2083
        %v2085 = vmul.f32 %v2082, %v2084
        %v2086 = vadd.f32 %v2082, %v2085
        %vm2087 = vweird.f32 %v1544
        %vm2088 = vweird.f32 %v2082
        %vm2089 = vmor %vm2087, %vm2088
        %v2090 = vsel %vm2089, %v2082, %v2086
        %v2091 = vand.u32 2147483647, %v1544
        %vm2092 = vcmp.eq.f32.partialorder %v2091, 8.507059e+37
        %v2093 = vand.u32 %v1544, 2147483648
        %v2094 = vor.u32 1.1754944e-38, %v2093
        %v2095 = vsel %vm2092, %v2094, %v2090
        %v2096 = vmul.f32 1.0, %v2095
        %v2097 = vrcp.pop %v1545
        %v2098 = vmul.f32 %v1545, %v2097
        %v2099 = vsub.f32 1.0, %v2098
        %v2100 = vmul.f32 %v2097, %v2099
        %v2101 = vadd.f32 %v2097, %v2100
        %vm2102 = vweird.f32 %v1545
        %vm2103 = vweird.f32 %v2097
        %vm2104 = vmor %vm2102, %vm2103
        %v2105 = vsel %vm2104, %v2097, %v2101
        %v2106 = vand.u32 2147483647, %v1545
        %vm2107 = vcmp.eq.f32.partialorder %v2106, 8.507059e+37
        %v2108 = vand.u32 %v1545, 2147483648
        %v2109 = vor.u32 1.1754944e-38, %v2108
        %v2110 = vsel %vm2107, %v2109, %v2105
        %v2111 = vmul.f32 1.0, %v2110
        %v2112 = vrcp.pop %v1546
        %v2113 = vmul.f32 %v1546, %v2112
        %v2114 = vsub.f32 1.0, %v2113
        %v2115 = vmul.f32 %v2112, %v2114
        %v2116 = vadd.f32 %v2112, %v2115
        %vm2117 = vweird.f32 %v1546
        %vm2118 = vweird.f32 %v2112
        %vm2119 = vmor %vm2117, %vm2118
        %v2120 = vsel %vm2119, %v2112, %v2116
        %v2121 = vand.u32 2147483647, %v1546
        %vm2122 = vcmp.eq.f32.partialorder %v2121, 8.507059e+37
        %v2123 = vand.u32 %v1546, 2147483648
        %v2124 = vor.u32 1.1754944e-38, %v2123
        %v2125 = vsel %vm2122, %v2124, %v2120
        %v2126 = vmul.f32 1.0, %v2125
        %v2127 = vrcp.pop %v1547
        %v2128 = vmul.f32 %v1547, %v2127
        %v2129 = vsub.f32 1.0, %v2128
        %v2130 = vmul.f32 %v2127, %v2129
        %v2131 = vadd.f32 %v2127, %v2130
        %vm2132 = vweird.f32 %v1547
        %vm2133 = vweird.f32 %v2127
        %vm2134 = vmor %vm2132, %vm2133
        %v2135 = vsel %vm2134, %v2127, %v2131
        %v2136 = vand.u32 2147483647, %v1547
        %vm2137 = vcmp.eq.f32.partialorder %v2136, 8.507059e+37
        %v2138 = vand.u32 %v1547, 2147483648
        %v2139 = vor.u32 1.1754944e-38, %v2138
        %v2140 = vsel %vm2137, %v2139, %v2135
        %v2141 = vmul.f32 1.0, %v2140
        %v2142 = vrcp.pop %v1548
        %v2143 = vmul.f32 %v1548, %v2142
        %v2144 = vsub.f32 1.0, %v2143
        %v2145 = vmul.f32 %v2142, %v2144
        %v2146 = vadd.f32 %v2142, %v2145
        %vm2147 = vweird.f32 %v1548
        %vm2148 = vweird.f32 %v2142
        %vm2149 = vmor %vm2147, %vm2148
        %v2150 = vsel %vm2149, %v2142, %v2146
        %v2151 = vand.u32 2147483647, %v1548
        %vm2152 = vcmp.eq.f32.partialorder %v2151, 8.507059e+37
        %v2153 = vand.u32 %v1548, 2147483648
        %v2154 = vor.u32 1.1754944e-38, %v2153
        %v2155 = vsel %vm2152, %v2154, %v2150
        %v2156 = vmul.f32 1.0, %v2155
        %v2157 = vrcp.pop %v1549
        %v2158 = vmul.f32 %v1549, %v2157
        %v2159 = vsub.f32 1.0, %v2158
        %v2160 = vmul.f32 %v2157, %v2159
        %v2161 = vadd.f32 %v2157, %v2160
        %vm2162 = vweird.f32 %v1549
        %vm2163 = vweird.f32 %v2157
        %vm2164 = vmor %vm2162, %vm2163
        %v2165 = vsel %vm2164, %v2157, %v2161
        %v2166 = vand.u32 2147483647, %v1549
        %vm2167 = vcmp.eq.f32.partialorder %v2166, 8.507059e+37
        %v2168 = vand.u32 %v1549, 2147483648
        %v2169 = vor.u32 1.1754944e-38, %v2168
        %v2170 = vsel %vm2167, %v2169, %v2165
        %v2171 = vmul.f32 1.0, %v2170
        %v2172 = vrcp.pop %v1550
        %v2173 = vmul.f32 %v1550, %v2172
        %v2174 = vsub.f32 1.0, %v2173
        %v2175 = vmul.f32 %v2172, %v2174
        %v2176 = vadd.f32 %v2172, %v2175
        %vm2177 = vweird.f32 %v1550
        %vm2178 = vweird.f32 %v2172
        %vm2179 = vmor %vm2177, %vm2178
        %v2180 = vsel %vm2179, %v2172, %v2176
        %v2181 = vand.u32 2147483647, %v1550
        %vm2182 = vcmp.eq.f32.partialorder %v2181, 8.507059e+37
        %v2183 = vand.u32 %v1550, 2147483648
        %v2184 = vor.u32 1.1754944e-38, %v2183
        %v2185 = vsel %vm2182, %v2184, %v2180
        %v2186 = vmul.f32 1.0, %v2185
        %v2187 = vrcp.pop %v1551
        %v2188 = vmul.f32 %v1551, %v2187
        %v2189 = vsub.f32 1.0, %v2188
        %v2190 = vmul.f32 %v2187, %v2189
        %v2191 = vadd.f32 %v2187, %v2190
        %vm2192 = vweird.f32 %v1551
        %vm2193 = vweird.f32 %v2187
        %vm2194 = vmor %vm2192, %vm2193
        %v2195 = vsel %vm2194, %v2187, %v2191
        %v2196 = vand.u32 2147483647, %v1551
        %vm2197 = vcmp.eq.f32.partialorder %v2196, 8.507059e+37
        %v2198 = vand.u32 %v1551, 2147483648
        %v2199 = vor.u32 1.1754944e-38, %v2198
        %v2200 = vsel %vm2197, %v2199, %v2195
        %v2201 = vmul.f32 1.0, %v2200
        %v2202 = vrcp.pop %v1552
        %v2203 = vmul.f32 %v1552, %v2202
        %v2204 = vsub.f32 1.0, %v2203
        %v2205 = vmul.f32 %v2202, %v2204
        %v2206 = vadd.f32 %v2202, %v2205
        %vm2207 = vweird.f32 %v1552
        %vm2208 = vweird.f32 %v2202
        %vm2209 = vmor %vm2207, %vm2208
        %v2210 = vsel %vm2209, %v2202, %v2206
        %v2211 = vand.u32 2147483647, %v1552
        %vm2212 = vcmp.eq.f32.partialorder %v2211, 8.507059e+37
        %v2213 = vand.u32 %v1552, 2147483648
        %v2214 = vor.u32 1.1754944e-38, %v2213
        %v2215 = vsel %vm2212, %v2214, %v2210
        %v2216 = vmul.f32 1.0, %v2215
        %v2217 = vrcp.pop %v1553
        %v2218 = vmul.f32 %v1553, %v2217
        %v2219 = vsub.f32 1.0, %v2218
        %v2220 = vmul.f32 %v2217, %v2219
        %v2221 = vadd.f32 %v2217, %v2220
        %vm2222 = vweird.f32 %v1553
        %vm2223 = vweird.f32 %v2217
        %vm2224 = vmor %vm2222, %vm2223
        %v2225 = vsel %vm2224, %v2217, %v2221
        %v2226 = vand.u32 2147483647, %v1553
        %vm2227 = vcmp.eq.f32.partialorder %v2226, 8.507059e+37
        %v2228 = vand.u32 %v1553, 2147483648
        %v2229 = vor.u32 1.1754944e-38, %v2228
        %v2230 = vsel %vm2227, %v2229, %v2225
        %v2231 = vmul.f32 1.0, %v2230
        %v2232 = vrcp.pop %v1554
        %v2233 = vmul.f32 %v1554, %v2232
        %v2234 = vsub.f32 1.0, %v2233
        %v2235 = vmul.f32 %v2232, %v2234
        %v2236 = vadd.f32 %v2232, %v2235
        %vm2237 = vweird.f32 %v1554
        %vm2238 = vweird.f32 %v2232
        %vm2239 = vmor %vm2237, %vm2238
        %v2240 = vsel %vm2239, %v2232, %v2236
        %v2241 = vand.u32 2147483647, %v1554
        %vm2242 = vcmp.eq.f32.partialorder %v2241, 8.507059e+37
        %v2243 = vand.u32 %v1554, 2147483648
        %v2244 = vor.u32 1.1754944e-38, %v2243
        %v2245 = vsel %vm2242, %v2244, %v2240
        %v2246 = vmul.f32 1.0, %v2245
        %v2247 = vrcp.pop %v1555
        %v2248 = vmul.f32 %v1555, %v2247
        %v2249 = vsub.f32 1.0, %v2248
        %v2250 = vmul.f32 %v2247, %v2249
        %v2251 = vadd.f32 %v2247, %v2250
        %vm2252 = vweird.f32 %v1555
        %vm2253 = vweird.f32 %v2247
        %vm2254 = vmor %vm2252, %vm2253
        %v2255 = vsel %vm2254, %v2247, %v2251
        %v2256 = vand.u32 2147483647, %v1555
        %vm2257 = vcmp.eq.f32.partialorder %v2256, 8.507059e+37
        %v2258 = vand.u32 %v1555, 2147483648
        %v2259 = vor.u32 1.1754944e-38, %v2258
        %v2260 = vsel %vm2257, %v2259, %v2255
        %v2261 = vmul.f32 1.0, %v2260
        %v2262 = vrcp.pop %v1556
        %v2263 = vmul.f32 %v1556, %v2262
        %v2264 = vsub.f32 1.0, %v2263
        %v2265 = vmul.f32 %v2262, %v2264
        %v2266 = vadd.f32 %v2262, %v2265
        %vm2267 = vweird.f32 %v1556
        %vm2268 = vweird.f32 %v2262
        %vm2269 = vmor %vm2267, %vm2268
        %v2270 = vsel %vm2269, %v2262, %v2266
        %v2271 = vand.u32 2147483647, %v1556
        %vm2272 = vcmp.eq.f32.partialorder %v2271, 8.507059e+37
        %v2273 = vand.u32 %v1556, 2147483648
        %v2274 = vor.u32 1.1754944e-38, %v2273
        %v2275 = vsel %vm2272, %v2274, %v2270
        %v2276 = vmul.f32 1.0, %v2275
        %v2277 = vrcp.pop %v1557
        %v2278 = vmul.f32 %v1557, %v2277
        %v2279 = vsub.f32 1.0, %v2278
        %v2280 = vmul.f32 %v2277, %v2279
        %v2281 = vadd.f32 %v2277, %v2280
        %vm2282 = vweird.f32 %v1557
        %vm2283 = vweird.f32 %v2277
        %vm2284 = vmor %vm2282, %vm2283
        %v2285 = vsel %vm2284, %v2277, %v2281
        %v2286 = vand.u32 2147483647, %v1557
        %vm2287 = vcmp.eq.f32.partialorder %v2286, 8.507059e+37
        %v2288 = vand.u32 %v1557, 2147483648
        %v2289 = vor.u32 1.1754944e-38, %v2288
        %v2290 = vsel %vm2287, %v2289, %v2285
        %v2291 = vmul.f32 1.0, %v2290
        %v2292 = vrcp.pop %v1558
        %v2293 = vmul.f32 %v1558, %v2292
        %v2294 = vsub.f32 1.0, %v2293
        %v2295 = vmul.f32 %v2292, %v2294
        %v2296 = vadd.f32 %v2292, %v2295
        %vm2297 = vweird.f32 %v1558
        %vm2298 = vweird.f32 %v2292
        %vm2299 = vmor %vm2297, %vm2298
        %v2300 = vsel %vm2299, %v2292, %v2296
        %v2301 = vand.u32 2147483647, %v1558
        %vm2302 = vcmp.eq.f32.partialorder %v2301, 8.507059e+37
        %v2303 = vand.u32 %v1558, 2147483648
        %v2304 = vor.u32 1.1754944e-38, %v2303
        %v2305 = vsel %vm2302, %v2304, %v2300
        %v2306 = vmul.f32 1.0, %v2305
        %v2307 = vrcp.pop %v1559
        %v2308 = vmul.f32 %v1559, %v2307
        %v2309 = vsub.f32 1.0, %v2308
        %v2310 = vmul.f32 %v2307, %v2309
        %v2311 = vadd.f32 %v2307, %v2310
        %vm2312 = vweird.f32 %v1559
        %vm2313 = vweird.f32 %v2307
        %vm2314 = vmor %vm2312, %vm2313
        %v2315 = vsel %vm2314, %v2307, %v2311
        %v2316 = vand.u32 2147483647, %v1559
        %vm2317 = vcmp.eq.f32.partialorder %v2316, 8.507059e+37
        %v2318 = vand.u32 %v1559, 2147483648
        %v2319 = vor.u32 1.1754944e-38, %v2318
        %v2320 = vsel %vm2317, %v2319, %v2315
        %v2321 = vmul.f32 1.0, %v2320
        %v2322 = vrcp.pop %v1560
        %v2323 = vmul.f32 %v1560, %v2322
        %v2324 = vsub.f32 1.0, %v2323
        %v2325 = vmul.f32 %v2322, %v2324
        %v2326 = vadd.f32 %v2322, %v2325
        %vm2327 = vweird.f32 %v1560
        %vm2328 = vweird.f32 %v2322
        %vm2329 = vmor %vm2327, %vm2328
        %v2330 = vsel %vm2329, %v2322, %v2326
        %v2331 = vand.u32 2147483647, %v1560
        %vm2332 = vcmp.eq.f32.partialorder %v2331, 8.507059e+37
        %v2333 = vand.u32 %v1560, 2147483648
        %v2334 = vor.u32 1.1754944e-38, %v2333
        %v2335 = vsel %vm2332, %v2334, %v2330
        %v2336 = vmul.f32 1.0, %v2335
        %v2337 = vrcp.pop %v1561
        %v2338 = vmul.f32 %v1561, %v2337
        %v2339 = vsub.f32 1.0, %v2338
        %v2340 = vmul.f32 %v2337, %v2339
        %v2341 = vadd.f32 %v2337, %v2340
        %vm2342 = vweird.f32 %v1561
        %vm2343 = vweird.f32 %v2337
        %vm2344 = vmor %vm2342, %vm2343
        %v2345 = vsel %vm2344, %v2337, %v2341
        %v2346 = vand.u32 2147483647, %v1561
        %vm2347 = vcmp.eq.f32.partialorder %v2346, 8.507059e+37
        %v2348 = vand.u32 %v1561, 2147483648
        %v2349 = vor.u32 1.1754944e-38, %v2348
        %v2350 = vsel %vm2347, %v2349, %v2345
        %v2351 = vmul.f32 1.0, %v2350
        %v2352 = vrcp.pop %v1562
        %v2353 = vmul.f32 %v1562, %v2352
        %v2354 = vsub.f32 1.0, %v2353
        %v2355 = vmul.f32 %v2352, %v2354
        %v2356 = vadd.f32 %v2352, %v2355
        %vm2357 = vweird.f32 %v1562
        %vm2358 = vweird.f32 %v2352
        %vm2359 = vmor %vm2357, %vm2358
        %v2360 = vsel %vm2359, %v2352, %v2356
        %v2361 = vand.u32 2147483647, %v1562
        %vm2362 = vcmp.eq.f32.partialorder %v2361, 8.507059e+37
        %v2363 = vand.u32 %v1562, 2147483648
        %v2364 = vor.u32 1.1754944e-38, %v2363
        %v2365 = vsel %vm2362, %v2364, %v2360
        %v2366 = vmul.f32 1.0, %v2365
        %v2367 = vrcp.pop %v1563
        %v2368 = vmul.f32 %v1563, %v2367
        %v2369 = vsub.f32 1.0, %v2368
        %v2370 = vmul.f32 %v2367, %v2369
        %v2371 = vadd.f32 %v2367, %v2370
        %vm2372 = vweird.f32 %v1563
        %vm2373 = vweird.f32 %v2367
        %vm2374 = vmor %vm2372, %vm2373
        %v2375 = vsel %vm2374, %v2367, %v2371
        %v2376 = vand.u32 2147483647, %v1563
        %vm2377 = vcmp.eq.f32.partialorder %v2376, 8.507059e+37
        %v2378 = vand.u32 %v1563, 2147483648
        %v2379 = vor.u32 1.1754944e-38, %v2378
        %v2380 = vsel %vm2377, %v2379, %v2375
        %v2381 = vmul.f32 1.0, %v2380
        %v2382 = vrcp.pop %v1564
        %v2383 = vmul.f32 %v1564, %v2382
        %v2384 = vsub.f32 1.0, %v2383
        %v2385 = vmul.f32 %v2382, %v2384
        %v2386 = vadd.f32 %v2382, %v2385
        %vm2387 = vweird.f32 %v1564
        %vm2388 = vweird.f32 %v2382
        %vm2389 = vmor %vm2387, %vm2388
        %v2390 = vsel %vm2389, %v2382, %v2386
        %v2391 = vand.u32 2147483647, %v1564
        %vm2392 = vcmp.eq.f32.partialorder %v2391, 8.507059e+37
        %v2393 = vand.u32 %v1564, 2147483648
        %v2394 = vor.u32 1.1754944e-38, %v2393
        %v2395 = vsel %vm2392, %v2394, %v2390
        %v2396 = vmul.f32 1.0, %v2395
        %v2397 = vrcp.pop %v1565
        %v2398 = vmul.f32 %v1565, %v2397
        %v2399 = vsub.f32 1.0, %v2398
        %v2400 = vmul.f32 %v2397, %v2399
        %v2401 = vadd.f32 %v2397, %v2400
        %vm2402 = vweird.f32 %v1565
        %vm2403 = vweird.f32 %v2397
        %vm2404 = vmor %vm2402, %vm2403
        %v2405 = vsel %vm2404, %v2397, %v2401
        %v2406 = vand.u32 2147483647, %v1565
        %vm2407 = vcmp.eq.f32.partialorder %v2406, 8.507059e+37
        %v2408 = vand.u32 %v1565, 2147483648
        %v2409 = vor.u32 1.1754944e-38, %v2408
        %v2410 = vsel %vm2407, %v2409, %v2405
        %v2411 = vmul.f32 1.0, %v2410
        %v2412 = vrcp.pop %v1566
        %v2413 = vmul.f32 %v1566, %v2412
        %v2414 = vsub.f32 1.0, %v2413
        %v2415 = vmul.f32 %v2412, %v2414
        %v2416 = vadd.f32 %v2412, %v2415
        %vm2417 = vweird.f32 %v1566
        %vm2418 = vweird.f32 %v2412
        %vm2419 = vmor %vm2417, %vm2418
        %v2420 = vsel %vm2419, %v2412, %v2416
        %v2421 = vand.u32 2147483647, %v1566
        %vm2422 = vcmp.eq.f32.partialorder %v2421, 8.507059e+37
        %v2423 = vand.u32 %v1566, 2147483648
        %v2424 = vor.u32 1.1754944e-38, %v2423
        %v2425 = vsel %vm2422, %v2424, %v2420
        %v2426 = vmul.f32 1.0, %v2425
        %v2427 = vrcp.pop %v1567
        %v2428 = vmul.f32 %v1567, %v2427
        %v2429 = vsub.f32 1.0, %v2428
        %v2430 = vmul.f32 %v2427, %v2429
        %v2431 = vadd.f32 %v2427, %v2430
        %vm2432 = vweird.f32 %v1567
        %vm2433 = vweird.f32 %v2427
        %vm2434 = vmor %vm2432, %vm2433
        %v2435 = vsel %vm2434, %v2427, %v2431
        %v2436 = vand.u32 2147483647, %v1567
        %vm2437 = vcmp.eq.f32.partialorder %v2436, 8.507059e+37
        %v2438 = vand.u32 %v1567, 2147483648
        %v2439 = vor.u32 1.1754944e-38, %v2438
        %v2440 = vsel %vm2437, %v2439, %v2435
        %v2441 = vmul.f32 1.0, %v2440
        %v2442 = vrcp.pop %v1568
        %v2443 = vmul.f32 %v1568, %v2442
        %v2444 = vsub.f32 1.0, %v2443
        %v2445 = vmul.f32 %v2442, %v2444
        %v2446 = vadd.f32 %v2442, %v2445
        %vm2447 = vweird.f32 %v1568
        %vm2448 = vweird.f32 %v2442
        %vm2449 = vmor %vm2447, %vm2448
        %v2450 = vsel %vm2449, %v2442, %v2446
        %v2451 = vand.u32 2147483647, %v1568
        %vm2452 = vcmp.eq.f32.partialorder %v2451, 8.507059e+37
        %v2453 = vand.u32 %v1568, 2147483648
        %v2454 = vor.u32 1.1754944e-38, %v2453
        %v2455 = vsel %vm2452, %v2454, %v2450
        %v2456 = vmul.f32 1.0, %v2455
        %v2457 = vrcp.pop %v1569
        %v2458 = vmul.f32 %v1569, %v2457
        %v2459 = vsub.f32 1.0, %v2458
        %v2460 = vmul.f32 %v2457, %v2459
        %v2461 = vadd.f32 %v2457, %v2460
        %vm2462 = vweird.f32 %v1569
        %vm2463 = vweird.f32 %v2457
        %vm2464 = vmor %vm2462, %vm2463
        %v2465 = vsel %vm2464, %v2457, %v2461
        %v2466 = vand.u32 2147483647, %v1569
        %vm2467 = vcmp.eq.f32.partialorder %v2466, 8.507059e+37
        %v2468 = vand.u32 %v1569, 2147483648
        %v2469 = vor.u32 1.1754944e-38, %v2468
        %v2470 = vsel %vm2467, %v2469, %v2465
        %v2471 = vmul.f32 1.0, %v2470
        %v2472 = vrcp.pop %v1570
        %v2473 = vmul.f32 %v1570, %v2472
        %v2474 = vsub.f32 1.0, %v2473
        %v2475 = vmul.f32 %v2472, %v2474
        %v2476 = vadd.f32 %v2472, %v2475
        %vm2477 = vweird.f32 %v1570
        %vm2478 = vweird.f32 %v2472
        %vm2479 = vmor %vm2477, %vm2478
        %v2480 = vsel %vm2479, %v2472, %v2476
        %v2481 = vand.u32 2147483647, %v1570
        %vm2482 = vcmp.eq.f32.partialorder %v2481, 8.507059e+37
        %v2483 = vand.u32 %v1570, 2147483648
        %v2484 = vor.u32 1.1754944e-38, %v2483
        %v2485 = vsel %vm2482, %v2484, %v2480
        %v2486 = vmul.f32 1.0, %v2485
        %v2487 = vrcp.pop %v1571
        %v2488 = vmul.f32 %v1571, %v2487
        %v2489 = vsub.f32 1.0, %v2488
        %v2490 = vmul.f32 %v2487, %v2489
        %v2491 = vadd.f32 %v2487, %v2490
        %vm2492 = vweird.f32 %v1571
        %vm2493 = vweird.f32 %v2487
        %vm2494 = vmor %vm2492, %vm2493
        %v2495 = vsel %vm2494, %v2487, %v2491
        %v2496 = vand.u32 2147483647, %v1571
        %vm2497 = vcmp.eq.f32.partialorder %v2496, 8.507059e+37
        %v2498 = vand.u32 %v1571, 2147483648
        %v2499 = vor.u32 1.1754944e-38, %v2498
        %v2500 = vsel %vm2497, %v2499, %v2495
        %v2501 = vmul.f32 1.0, %v2500
        %v2502 = vmul.f32 %v1262, %v1586
        %v2503 = vmul.f32 %v1263, %v1601
        %v2504 = vmul.f32 %v1264, %v1616
        %v2505 = vmul.f32 %v1265, %v1631
        %v2506 = vmul.f32 %v1266, %v1646
        %v2507 = vmul.f32 %v1267, %v1661
        %v2508 = vmul.f32 %v1268, %v1676
        %v2509 = vmul.f32 %v1269, %v1691
        %v2510 = vmul.f32 %v1270, %v1706
        %v2511 = vmul.f32 %v1271, %v1721
        %v2512 = vmul.f32 %v1272, %v1736
        %v2513 = vmul.f32 %v1273, %v1751
        %v2514 = vmul.f32 %v1274, %v1766
        %v2515 = vmul.f32 %v1275, %v1781
        %v2516 = vmul.f32 %v1276, %v1796
        %v2517 = vmul.f32 %v1277, %v1811
        %v2518 = vmul.f32 %v1278, %v1826
        %v2519 = vmul.f32 %v1279, %v1841
        %v2520 = vmul.f32 %v1280, %v1856
        %v2521 = vmul.f32 %v1281, %v1871
        %v2522 = vmul.f32 %v1282, %v1886
        %v2523 = vmul.f32 %v1283, %v1901
        %v2524 = vmul.f32 %v1284, %v1916
        %v2525 = vmul.f32 %v1285, %v1931
        %v2526 = vmul.f32 %v1286, %v1946
        %v2527 = vmul.f32 %v1287, %v1961
        %v2528 = vmul.f32 %v1288, %v1976
        %v2529 = vmul.f32 %v1289, %v1991
        %v2530 = vmul.f32 %v1290, %v2006
        %v2531 = vmul.f32 %v1291, %v2021
        %v2532 = vmul.f32 %v1292, %v2036
        %v2533 = vmul.f32 %v1293, %v2051
        %v2534 = vmul.f32 %v1294, %v2066
        %v2535 = vmul.f32 %v1295, %v2081
        %v2536 = vmul.f32 %v1296, %v2096
        %v2537 = vmul.f32 %v1297, %v2111
        %v2538 = vmul.f32 %v1298, %v2126
        %v2539 = vmul.f32 %v1299, %v2141
        %v2540 = vmul.f32 %v1300, %v2156
        %v2541 = vmul.f32 %v1301, %v2171
        %v2542 = vmul.f32 %v1302, %v2186
        %v2543 = vmul.f32 %v1303, %v2201
        %v2544 = vmul.f32 %v1304, %v2216
        %v2545 = vmul.f32 %v1305, %v2231
        %v2546 = vmul.f32 %v1306, %v2246
        %v2547 = vmul.f32 %v1307, %v2261
        %v2548 = vmul.f32 %v1308, %v2276
        %v2549 = vmul.f32 %v1309, %v2291
        %v2550 = vmul.f32 %v1310, %v2306
        %v2551 = vmul.f32 %v1311, %v2321
        %v2552 = vmul.f32 %v1312, %v2336
        %v2553 = vmul.f32 %v1313, %v2351
        %v2554 = vmul.f32 %v1314, %v2366
        %v2555 = vmul.f32 %v1315, %v2381
        %v2556 = vmul.f32 %v1316, %v2396
        %v2557 = vmul.f32 %v1317, %v2411
        %v2558 = vmul.f32 %v1318, %v2426
        %v2559 = vmul.f32 %v1319, %v2441
        %v2560 = vmul.f32 %v1320, %v2456
        %v2561 = vmul.f32 %v1321, %v2471
        %v2562 = vmul.f32 %v1322, %v2486
        %v2563 = vmul.f32 %v1323, %v2501
        %v2564 = vld [vmem:[%s433] sm:$0xff]
        %v2565 = vld [vmem:[%s433 + $0x8] sm:$0xff]
        %v2566 = vld [vmem:[%s433 + $0x10] sm:$0xff]
        %v2567 = vld [vmem:[%s433 + $0x18] sm:$0xff]
        %v2568 = vld [vmem:[%s433 + $0x20] sm:$0xff]
        %v2569 = vld [vmem:[%s433 + $0x28] sm:$0xff]
        %v2570 = vld [vmem:[%s433 + $0x30] sm:$0xff]
        %v2571 = vld [vmem:[%s433 + $0x38] sm:$0xff]
        %v2572 = vld [vmem:[%s433 + $0x40] sm:$0xff]
        %v2573 = vld [vmem:[%s433 + $0x48] sm:$0xff]
        %v2574 = vld [vmem:[%s433 + $0x50] sm:$0xff]
        %v2575 = vld [vmem:[%s433 + $0x58] sm:$0xff]
        %v2576 = vld [vmem:[%s433 + $0x60] sm:$0xff]
        %v2577 = vld [vmem:[%s433 + $0x68] sm:$0xff]
        %v2578 = vld [vmem:[%s433 + $0x70] sm:$0xff]
        %v2579 = vld [vmem:[%s433 + $0x78] sm:$0xff]
        %v2580 = vld [vmem:[%s433 + $0x80] sm:$0xff]
        %v2581 = vld [vmem:[%s433 + $0x88] sm:$0xff]
        %v2582 = vld [vmem:[%s433 + $0x90] sm:$0xff]
        %v2583 = vld [vmem:[%s433 + $0x98] sm:$0xff]
        %v2584 = vld [vmem:[%s433 + $0xa0] sm:$0xff]
        %v2585 = vld [vmem:[%s433 + $0xa8] sm:$0xff]
        %v2586 = vld [vmem:[%s433 + $0xb0] sm:$0xff]
        %v2587 = vld [vmem:[%s433 + $0xb8] sm:$0xff]
        %v2588 = vld [vmem:[%s433 + $0xc0] sm:$0xff]
        %v2589 = vld [vmem:[%s433 + $0xc8] sm:$0xff]
        %v2590 = vld [vmem:[%s433 + $0xd0] sm:$0xff]
        %v2591 = vld [vmem:[%s433 + $0xd8] sm:$0xff]
        %v2592 = vld [vmem:[%s433 + $0xe0] sm:$0xff]
        %v2593 = vld [vmem:[%s433 + $0xe8] sm:$0xff]
        %v2594 = vld [vmem:[%s433 + $0xf0] sm:$0xff]
        %v2595 = vld [vmem:[%s433 + $0xf8] sm:$0xff]
        %v2596 = vld [vmem:[%s433 + $0x100] sm:$0xff]
        %v2597 = vld [vmem:[%s433 + $0x108] sm:$0xff]
        %v2598 = vld [vmem:[%s433 + $0x110] sm:$0xff]
        %v2599 = vld [vmem:[%s433 + $0x118] sm:$0xff]
        %v2600 = vld [vmem:[%s433 + $0x120] sm:$0xff]
        %v2601 = vld [vmem:[%s433 + $0x128] sm:$0xff]
        %v2602 = vld [vmem:[%s433 + $0x130] sm:$0xff]
        %v2603 = vld [vmem:[%s433 + $0x138] sm:$0xff]
        %v2604 = vld [vmem:[%s433 + $0x140] sm:$0xff]
        %v2605 = vld [vmem:[%s433 + $0x148] sm:$0xff]
        %v2606 = vld [vmem:[%s433 + $0x150] sm:$0xff]
        %v2607 = vld [vmem:[%s433 + $0x158] sm:$0xff]
        %v2608 = vld [vmem:[%s433 + $0x160] sm:$0xff]
        %v2609 = vld [vmem:[%s433 + $0x168] sm:$0xff]
        %v2610 = vld [vmem:[%s433 + $0x170] sm:$0xff]
        %v2611 = vld [vmem:[%s433 + $0x178] sm:$0xff]
        %v2612 = vld [vmem:[%s433 + $0x180] sm:$0xff]
        %v2613 = vld [vmem:[%s433 + $0x188] sm:$0xff]
        %v2614 = vld [vmem:[%s433 + $0x190] sm:$0xff]
        %v2615 = vld [vmem:[%s433 + $0x198] sm:$0xff]
        %v2616 = vld [vmem:[%s433 + $0x1a0] sm:$0xff]
        %v2617 = vld [vmem:[%s433 + $0x1a8] sm:$0xff]
        %v2618 = vld [vmem:[%s433 + $0x1b0] sm:$0xff]
        %v2619 = vld [vmem:[%s433 + $0x1b8] sm:$0xff]
        %v2620 = vld [vmem:[%s433 + $0x1c0] sm:$0xff]
        %v2621 = vld [vmem:[%s433 + $0x1c8] sm:$0xff]
        %v2622 = vld [vmem:[%s433 + $0x1d0] sm:$0xff]
        %v2623 = vld [vmem:[%s433 + $0x1d8] sm:$0xff]
        %v2624 = vld [vmem:[%s433 + $0x1e0] sm:$0xff]
        %v2625 = vld [vmem:[%s433 + $0x1e8] sm:$0xff]
        %v2626 = vadd.f32 %v2502, %v2564
        %v2627 = vadd.f32 %v2503, %v2565
        %v2628 = vadd.f32 %v2504, %v2566
        %v2629 = vadd.f32 %v2505, %v2567
        %v2630 = vadd.f32 %v2506, %v2568
        %v2631 = vadd.f32 %v2507, %v2569
        %v2632 = vadd.f32 %v2508, %v2570
        %v2633 = vadd.f32 %v2509, %v2571
        %v2634 = vadd.f32 %v2510, %v2572
        %v2635 = vadd.f32 %v2511, %v2573
        %v2636 = vadd.f32 %v2512, %v2574
        %v2637 = vadd.f32 %v2513, %v2575
        %v2638 = vadd.f32 %v2514, %v2576
        %v2639 = vadd.f32 %v2515, %v2577
        %v2640 = vadd.f32 %v2516, %v2578
        %v2641 = vadd.f32 %v2517, %v2579
        %v2642 = vadd.f32 %v2518, %v2580
        %v2643 = vadd.f32 %v2519, %v2581
        %v2644 = vadd.f32 %v2520, %v2582
        %v2645 = vadd.f32 %v2521, %v2583
        %v2646 = vadd.f32 %v2522, %v2584
        %v2647 = vadd.f32 %v2523, %v2585
        %v2648 = vadd.f32 %v2524, %v2586
        %v2649 = vadd.f32 %v2525, %v2587
        %v2650 = vadd.f32 %v2526, %v2588
        %v2651 = vadd.f32 %v2527, %v2589
        %v2652 = vadd.f32 %v2528, %v2590
        %v2653 = vadd.f32 %v2529, %v2591
        %v2654 = vadd.f32 %v2530, %v2592
        %v2655 = vadd.f32 %v2531, %v2593
        %v2656 = vadd.f32 %v2532, %v2594
        %v2657 = vadd.f32 %v2533, %v2595
        %v2658 = vadd.f32 %v2534, %v2596
        %v2659 = vadd.f32 %v2535, %v2597
        %v2660 = vadd.f32 %v2536, %v2598
        %v2661 = vadd.f32 %v2537, %v2599
        %v2662 = vadd.f32 %v2538, %v2600
        %v2663 = vadd.f32 %v2539, %v2601
        %v2664 = vadd.f32 %v2540, %v2602
        %v2665 = vadd.f32 %v2541, %v2603
        %v2666 = vadd.f32 %v2542, %v2604
        %v2667 = vadd.f32 %v2543, %v2605
        %v2668 = vadd.f32 %v2544, %v2606
        %v2669 = vadd.f32 %v2545, %v2607
        %v2670 = vadd.f32 %v2546, %v2608
        %v2671 = vadd.f32 %v2547, %v2609
        %v2672 = vadd.f32 %v2548, %v2610
        %v2673 = vadd.f32 %v2549, %v2611
        %v2674 = vadd.f32 %v2550, %v2612
        %v2675 = vadd.f32 %v2551, %v2613
        %v2676 = vadd.f32 %v2552, %v2614
        %v2677 = vadd.f32 %v2553, %v2615
        %v2678 = vadd.f32 %v2554, %v2616
        %v2679 = vadd.f32 %v2555, %v2617
        %v2680 = vadd.f32 %v2556, %v2618
        %v2681 = vadd.f32 %v2557, %v2619
        %v2682 = vadd.f32 %v2558, %v2620
        %v2683 = vadd.f32 %v2559, %v2621
        %v2684 = vadd.f32 %v2560, %v2622
        %v2685 = vadd.f32 %v2561, %v2623
        %v2686 = vadd.f32 %v2562, %v2624
        %v2687 = vadd.f32 %v2563, %v2625
        %2688 = vst [vmem:[%s492] sm:$0xff] %v2626
        %2689 = vst [vmem:[%s492 + $0x8] sm:$0xff] %v2627
        %2690 = vst [vmem:[%s492 + $0x10] sm:$0xff] %v2628
        %2691 = vst [vmem:[%s492 + $0x18] sm:$0xff] %v2629
        %2692 = vst [vmem:[%s492 + $0x20] sm:$0xff] %v2630
        %2693 = vst [vmem:[%s492 + $0x28] sm:$0xff] %v2631
        %2694 = vst [vmem:[%s492 + $0x30] sm:$0xff] %v2632
        %2695 = vst [vmem:[%s492 + $0x38] sm:$0xff] %v2633
        %2696 = vst [vmem:[%s492 + $0x40] sm:$0xff] %v2634
        %2697 = vst [vmem:[%s492 + $0x48] sm:$0xff] %v2635
        %2698 = vst [vmem:[%s492 + $0x50] sm:$0xff] %v2636
        %2699 = vst [vmem:[%s492 + $0x58] sm:$0xff] %v2637
        %2700 = vst [vmem:[%s492 + $0x60] sm:$0xff] %v2638
        %2701 = vst [vmem:[%s492 + $0x68] sm:$0xff] %v2639
        %2702 = vst [vmem:[%s492 + $0x70] sm:$0xff] %v2640
        %2703 = vst [vmem:[%s492 + $0x78] sm:$0xff] %v2641
        %2704 = vst [vmem:[%s492 + $0x80] sm:$0xff] %v2642
        %2705 = vst [vmem:[%s492 + $0x88] sm:$0xff] %v2643
        %2706 = vst [vmem:[%s492 + $0x90] sm:$0xff] %v2644
        %2707 = vst [vmem:[%s492 + $0x98] sm:$0xff] %v2645
        %2708 = vst [vmem:[%s492 + $0xa0] sm:$0xff] %v2646
        %2709 = vst [vmem:[%s492 + $0xa8] sm:$0xff] %v2647
        %2710 = vst [vmem:[%s492 + $0xb0] sm:$0xff] %v2648
        %2711 = vst [vmem:[%s492 + $0xb8] sm:$0xff] %v2649
        %2712 = vst [vmem:[%s492 + $0xc0] sm:$0xff] %v2650
        %2713 = vst [vmem:[%s492 + $0xc8] sm:$0xff] %v2651
        %2714 = vst [vmem:[%s492 + $0xd0] sm:$0xff] %v2652
        %2715 = vst [vmem:[%s492 + $0xd8] sm:$0xff] %v2653
        %2716 = vst [vmem:[%s492 + $0xe0] sm:$0xff] %v2654
        %2717 = vst [vmem:[%s492 + $0xe8] sm:$0xff] %v2655
        %2718 = vst [vmem:[%s492 + $0xf0] sm:$0xff] %v2656
        %2719 = vst [vmem:[%s492 + $0xf8] sm:$0xff] %v2657
        %2720 = vst [vmem:[%s492 + $0x100] sm:$0xff] %v2658
        %2721 = vst [vmem:[%s492 + $0x108] sm:$0xff] %v2659
        %2722 = vst [vmem:[%s492 + $0x110] sm:$0xff] %v2660
        %2723 = vst [vmem:[%s492 + $0x118] sm:$0xff] %v2661
        %2724 = vst [vmem:[%s492 + $0x120] sm:$0xff] %v2662
        %2725 = vst [vmem:[%s492 + $0x128] sm:$0xff] %v2663
        %2726 = vst [vmem:[%s492 + $0x130] sm:$0xff] %v2664
        %2727 = vst [vmem:[%s492 + $0x138] sm:$0xff] %v2665
        %2728 = vst [vmem:[%s492 + $0x140] sm:$0xff] %v2666
        %2729 = vst [vmem:[%s492 + $0x148] sm:$0xff] %v2667
        %2730 = vst [vmem:[%s492 + $0x150] sm:$0xff] %v2668
        %2731 = vst [vmem:[%s492 + $0x158] sm:$0xff] %v2669
        %2732 = vst [vmem:[%s492 + $0x160] sm:$0xff] %v2670
        %2733 = vst [vmem:[%s492 + $0x168] sm:$0xff] %v2671
        %2734 = vst [vmem:[%s492 + $0x170] sm:$0xff] %v2672
        %2735 = vst [vmem:[%s492 + $0x178] sm:$0xff] %v2673
        %2736 = vst [vmem:[%s492 + $0x180] sm:$0xff] %v2674
        %2737 = vst [vmem:[%s492 + $0x188] sm:$0xff] %v2675
        %2738 = vst [vmem:[%s492 + $0x190] sm:$0xff] %v2676
        %2739 = vst [vmem:[%s492 + $0x198] sm:$0xff] %v2677
        %2740 = vst [vmem:[%s492 + $0x1a0] sm:$0xff] %v2678
        %2741 = vst [vmem:[%s492 + $0x1a8] sm:$0xff] %v2679
        %2742 = vst [vmem:[%s492 + $0x1b0] sm:$0xff] %v2680
        %2743 = vst [vmem:[%s492 + $0x1b8] sm:$0xff] %v2681
        %2744 = vst [vmem:[%s492 + $0x1c0] sm:$0xff] %v2682
        %2745 = vst [vmem:[%s492 + $0x1c8] sm:$0xff] %v2683
        %2746 = vst [vmem:[%s492 + $0x1d0] sm:$0xff] %v2684
        %2747 = vst [vmem:[%s492 + $0x1d8] sm:$0xff] %v2685
        %2748 = vst [vmem:[%s492 + $0x1e0] sm:$0xff] %v2686
        %2749 = vst [vmem:[%s492 + $0x1e8] sm:$0xff] %v2687
        %s2750 = sand.u32 %s203, 1
        %s2751 = scalar_lea.sflag [#allocation6], %s2750
        %s2752 = sand.u32 %s203, 1
        %s2753 = smul.addr %s2752, 496
        %s2754 = scalar_lea.vmem [#allocation7], %s2753
        // Predicated region
        $region95: #{tpu_custom_call.1} parent=81 // pred_check
          %p2755 = pneg %p213
        $region96: #{tpu_custom_call.1} parent=81 // pred_check_branch
          %2757 = sbr.rel (%p2755) target = $region98
        $region97: #{tpu_custom_call.1} parent=81 // pred_region
          %s2758 = smul.u32 31, %s27
          %s2759 = smul.u32 2, %s28
          %s2760 = ssub.s32 32, %s2758
          %p2761 = scmp.lt.s32.totalorder %s2760, 31
          %s2762 = scalar_select %p2761, %s2760, 31
          %s2763 = smul.u32 8, %s2762
          %s2764 = smul.u32 %s2763, 2
          %s2765 = ssub.s32 496, %s2764
          %s2766 = sshll.u32 %s2765, 4
          %2767 = vsyncadd %s2751, %s2766
          %p2768 = scmp.ne.s32.totalorder 0, %s2764
          %s2769 = smul.addr %s2758, 6
          %s2770 = sadd.s32 %s2759, %s2769
          %s2771 = smul.addr %s2770, 8
          %s2772 = scalar_lea.hbm %s6, %s2771
          %s2773 = smul.u32 16, %s2762
          %s2774 = sshll.u32 %s2754, 4
          %s2775 = int_to_ptr.vmem [resolvable:$true] %s2774
          %s2776 = sshll.u32 %s2772, 4
          %s2777 = int_to_ptr.hbm [resolvable:$true] %s2776
          %s2778 = sshll.u32 %s2773, 4
          %2782 = dma.vmem_to_hbm [thread:$0]  (%p2768), %s2775, %s2778, %s2777, %s2751, 256, 768, 16
        $region98: #{tpu_custom_call.1} parent=81 // pred_fallthru
          _
      $region82: #{tpu_custom_call.1} parent=5 // pred_fallthru
        _
      %p2783 = scmp.le.s32.totalorder 2, %s18
      // Predicated region
      $region99: #{tpu_custom_call.1} parent=5 // pred_check
        %p2784 = pneg %p2783
      $region100: #{tpu_custom_call.1} parent=5 // pred_check_branch
        %2786 = sbr.rel (%p2784) target = $region102
      $region101: #{tpu_custom_call.1} parent=5 // pred_region
        %s2787 = ssub.s32 %s18, 2
        // Predicated region
        $region103: #{tpu_custom_call.1} parent=101 // pred_check
          %p2788 = pneg %p219
        $region104: #{tpu_custom_call.1} parent=101 // pred_check_branch
          %2790 = sbr.rel (%p2788) target = $region106
        $region105: #{tpu_custom_call.1} parent=101 // pred_region
          %s2791 = sand.u32 %s204, 1
          %s2792 = scalar_lea.sflag [#allocation6], %s2791
          %s2793 = sand.u32 %s204, 1
          %s2794 = smul.addr %s2793, 496
          %s2795 = scalar_lea.vmem [#allocation7], %s2794
          %2797 = dma.done %s2792, 7936
        $region106: #{tpu_custom_call.1} parent=101 // pred_fallthru
          _
      $region102: #{tpu_custom_call.1} parent=5 // pred_fallthru
        _
    $region6: #{tpu_custom_call.1} parent=1 // loop_footer
      %s22 = sadd.s32 1, %s18
    $region7: #{tpu_custom_call.1} parent=1 // loop_footer_branch
      %17 = sbr.rel target = $region3
    $region8: #{tpu_custom_call.1} parent=1 // loop_exit
      _
    %2798 = vsyncpa [#allocation5], 1
    %s2799 = scalar_lea.sflag [#allocation5], 1
    %2800 = vsyncpa %s2799, 1
    %2801 = vsyncpa [#allocation6], 1
    %s2802 = scalar_lea.sflag [#allocation6], 1
    %2803 = vsyncpa %s2802, 1

</llo_original>
